<compile_context>
chip_gen: v5e
topology: v5e:2x2
jax: 0.10.0
libtpu: 0.0.40
codegen_flags: <defaults>
</compile_context>

<pallas_src>
import functools

import jax
import jax.numpy as jnp
import numpy as np
from jax.experimental import pallas as pl
from jax.experimental.pallas import tpu as pltpu


def tac_kernel(x_ref, w_ref, b_ref, thr_ref, out_ref, *, ws, sharpness):
    # x_ref:   (NB, C, TH, W)  VMEM  -- NCHW strip (native dtype), TH % ws == 0
    # w_ref:   (Cout*Cin,)     SMEM  -- flattened 1x1 conv weight, pre-scaled 1/Cout
    # b_ref:   (Cout,)         SMEM  -- bias, pre-scaled 1/Cout
    # thr_ref: (1,)            SMEM  -- learnable threshold (scalar)
    # out_ref: (NB, TH//ws, nW) VMEM -- binary mask tile
    nb, cin, th, wdim = x_ref.shape
    cout = b_ref.shape[0]
    nhs = th // ws                       # window-rows in this strip
    nw = wdim // ws                      # window-cols
    rows = nb * th                       # batch images stacked along sublanes

    # ---- 1x1 conv + LeakyReLU(0.1) + channel mean (fused, scale pre-folded) ---
    planes = []
    for bb in range(nb):
        accs = [None] * cout
        for c in range(cin):
            xc = x_ref[bb, c].astype(jnp.float32)          # (TH, W), cast in-kernel
            for o in range(cout):
                t = w_ref[o * cin + c] * xc
                accs[o] = t if accs[o] is None else accs[o] + t
        mplane = None
        for o in range(cout):
            a = accs[o] + b_ref[o]
            a = jnp.maximum(a, 0.1 * a)                    # LeakyReLU(0.1)
            mplane = a if mplane is None else mplane + a   # already the channel mean
        planes.append(mplane)
    m = planes[0] if nb == 1 else jnp.concatenate(planes, axis=0)   # (rows, W)

    # ---- separable one-hot window pooling, matrices built in-kernel ---------
    # prow: (rows//ws, rows)  one-hot over row-windows (batch stacking is safe
    #       because each image contributes TH rows, a multiple of ws).
    ri = jax.lax.broadcasted_iota(jnp.int32, (rows // ws, rows), 0)
    hi = jax.lax.broadcasted_iota(jnp.int32, (rows // ws, rows), 1)
    prow = ((hi >= ri * ws) & (hi < ri * ws + ws)).astype(jnp.float32)
    # pcol: (W, nW) one-hot over column-windows.
    wi = jax.lax.broadcasted_iota(jnp.int32, (wdim, nw), 0)
    ci = jax.lax.broadcasted_iota(jnp.int32, (wdim, nw), 1)
    pcol = ((wi >= ci * ws) & (wi < ci * ws + ws)).astype(jnp.float32)

    hp = jax.lax.Precision.HIGHEST       # exact f32 window sums (not bf16 passes)
    a1 = jnp.dot(m, pcol, preferred_element_type=jnp.float32, precision=hp)
    a2 = jnp.dot(m * m, pcol, preferred_element_type=jnp.float32, precision=hp)
    s1 = jnp.dot(prow, a1, preferred_element_type=jnp.float32, precision=hp)   # (nb*nhs, nW)
    s2 = jnp.dot(prow, a2, preferred_element_type=jnp.float32, precision=hp)   # (nb*nhs, nW)

    # ---- one-pass unbiased variance (torch.var default, N-1) ----------------
    n = float(ws * ws)
    var = (s2 - s1 * s1 * (1.0 / n)) * (1.0 / (n - 1.0))

    thr = thr_ref[0]
    # Forward value of the STE trick: mask = (soft_mask > 0.5).
    # For sharpness > 0:  1 - sigmoid(s*(thr - var)) > 0.5  <=>  var > thr,
    # so the EUP sigmoid is skipped entirely.
    if sharpness > 0.0:
        mask = (var > thr).astype(jnp.float32)
    else:
        soft = 1.0 - jax.nn.sigmoid(jnp.float32(sharpness) * (thr - var))
        mask = (soft > 0.5).astype(jnp.float32)

    for bb in range(nb):
        out_ref[bb] = mask[bb * nhs:(bb + 1) * nhs, :]


def _choose_tiling(B, C, H, W, ws, itemsize, block_budget_bytes=4 << 20):
    """Pick (NB, TH): whole batch in one block if tiny, else ws-aligned H strips."""
    if B * C * H * W * itemsize <= block_budget_bytes:
        return B, H
    th = ws
    for k in range(H // ws, 0, -1):
        cand = k * ws
        if H % cand == 0 and C * cand * W * itemsize <= block_budget_bytes:
            th = cand
            break
    return 1, th


def tac_forward(x_nchw, w, b, thresh, *, window_size, sharpness=10.0):
    """x_nchw: (B, C, H, W) any float dtype; w: (Cout, Cin) 1x1 conv weight; b: (Cout,)."""
    B, C, H, W = x_nchw.shape
    Co = w.shape[0]
    ws = window_size
    assert H % ws == 0 and W % ws == 0
    nH, nW = H // ws, W // ws

    itemsize = jnp.dtype(x_nchw.dtype).itemsize
    NB, TH = _choose_tiling(B, C, H, W, ws, itemsize)
    nhs = TH // ws
    grid = (B // NB, H // TH)

    # Fold the 1/Cout channel-mean into the conv weight/bias (valid because
    # LeakyReLU is positively homogeneous), flatten for SMEM scalar reads.
    wf = (jnp.asarray(w, jnp.float32) * (1.0 / Co)).reshape(-1)
    bf = (jnp.asarray(b, jnp.float32) * (1.0 / Co)).reshape(-1)
    thr = jnp.asarray([thresh], dtype=jnp.float32)

    kernel = functools.partial(tac_kernel, ws=ws, sharpness=float(sharpness))

    out = pl.pallas_call(
        kernel,
        out_shape=jax.ShapeDtypeStruct((B, nH, nW), jnp.float32),
        grid=grid,
        in_specs=[
            pl.BlockSpec((NB, C, TH, W), lambda bi, si: (bi, 0, si, 0)),
            pl.BlockSpec(memory_space=pltpu.MemorySpace.SMEM),   # w (flat, scaled)
            pl.BlockSpec(memory_space=pltpu.MemorySpace.SMEM),   # b (scaled)
            pl.BlockSpec(memory_space=pltpu.MemorySpace.SMEM),   # thresh
        ],
        out_specs=pl.BlockSpec((NB, nhs, nW), lambda bi, si: (bi, si, 0)),
        compiler_params=pltpu.CompilerParams(
            dimension_semantics=("parallel", "parallel"),
            vmem_limit_bytes=32 * 1024 * 1024),
    )(x_nchw, wf, bf, thr)

    return out.reshape(B, nH * nW)                       # matches 'b (h w)'


def tac_reference(x_nchw, w, b, thresh, *, window_size, sharpness=10.0):
    """Pure-JAX reference mirroring the PyTorch forward. Returns (mask, var)."""
    B, C, H, W = x_nchw.shape
    ws = window_size
    nH, nW = H // ws, W // ws
    xf = x_nchw.astype(jnp.float32)
    y = jnp.einsum("oc,bchw->bohw", w, xf, precision="highest") + b[None, :, None, None]
    y = jnp.where(y >= 0.0, y, 0.1 * y)
    m = jnp.mean(y, axis=1, keepdims=True)               # (B, 1, H, W)
    r = m.reshape(B, 1, nH, ws, nW, ws)
    r = jnp.transpose(r, (0, 2, 4, 3, 5, 1)).reshape(B, nH * nW, ws * ws)
    var = jnp.var(r, axis=-1, ddof=1)
    soft = 1.0 - jax.nn.sigmoid(sharpness * (thresh - var))
    return (soft > 0.5).astype(jnp.float32), var


if __name__ == "__main__":
    # Small shapes consistent with the module: n_feats=8 -> 2 conv-out channels,
    # 16x16 spatial, window_size=4 -> 16 windows of 16 pixels each.
    B, n_feats, H, W = 2, 8, 16, 16
    window_size = 4
    init_thresh = 0.5
    sharpness = 10.0
    Cout = n_feats // 4

    key = jax.random.PRNGKey(0)
    kx, kw, kb = jax.random.split(key, 3)
    x = jax.random.normal(kx, (B, n_feats, H, W), dtype=jnp.float32)
    w = jax.random.normal(kw, (Cout, n_feats), dtype=jnp.float32) * 0.5  # (Cout, Cin)
    b = jax.random.normal(kb, (Cout,), dtype=jnp.float32) * 0.1

    mask = tac_forward(x, w, b, init_thresh,
                       window_size=window_size, sharpness=sharpness)
    mask = jax.block_until_ready(mask)

    ref_mask, ref_var = tac_reference(x, w, b, init_thresh,
                                      window_size=window_size, sharpness=sharpness)
    ref_mask = jax.block_until_ready(ref_mask)

    assert mask.shape == (B, (H // window_size) * (W // window_size))

    # Tolerance-aware check (per review): the mask is a hard threshold of the
    # window variance, so only compare windows whose variance is not within
    # fp noise of the threshold; require the vast majority to be comparable.
    gap = np.abs(np.asarray(ref_var) - init_thresh)
    safe = gap > 1e-4
    assert safe.mean() > 0.9
    np.testing.assert_array_equal(np.asarray(mask)[safe], np.asarray(ref_mask)[safe])

    print("KERNEL_OK")
</pallas_src>

<mosaic_0001>
module attributes {stable_mosaic.version = 11 : i64} {
  func.func @tac_kernel(%arg0: i32, %arg1: i32, %arg2: memref<2x8x16x16xf32, #tpu.memory_space<vmem>>, %arg3: memref<16xf32, #tpu.memory_space<smem>>, %arg4: memref<2xf32, #tpu.memory_space<smem>>, %arg5: memref<1xf32, #tpu.memory_space<smem>>, %arg6: memref<2x4x4xf32, #tpu.memory_space<vmem>>) attributes {dimension_semantics = [#tpu.dimension_semantics<parallel>, #tpu.dimension_semantics<parallel>], iteration_bounds = array<i64: 1, 1>, scalar_prefetch = 0 : i64, scratch_operands = 0 : i64, tpu.core_type = #tpu.core_type<tc>, window_params = [{transform_indices = @transform_0, window_bounds = array<i64: 2, 8, 16, 16>}, {transform_indices = @transform_1, window_bounds = array<i64: 16>}, {transform_indices = @transform_2, window_bounds = array<i64: 2>}, {transform_indices = @transform_3, window_bounds = array<i64: 1>}, {transform_indices = @transform_4, window_bounds = array<i64: 2, 4, 4>}]} {
    %c0 = arith.constant 0 : index
    %c0_0 = arith.constant 0 : index
    %c0_1 = arith.constant 0 : index
    %c0_2 = arith.constant 0 : index
    %0 = vector.load %arg2[%c0, %c0_0, %c0_1, %c0_2] : memref<2x8x16x16xf32, #tpu.memory_space<vmem>>, vector<1x1x16x16xf32>
    %1 = vector.shape_cast %0 : vector<1x1x16x16xf32> to vector<16x16xf32>
    %c0_3 = arith.constant 0 : index
    %2 = memref.load %arg3[%c0_3] : memref<16xf32, #tpu.memory_space<smem>>
    %3 = vector.broadcast %2 : f32 to vector<16x16xf32>
    %4 = arith.mulf %3, %1 : vector<16x16xf32>
    %c8 = arith.constant 8 : index
    %5 = memref.load %arg3[%c8] : memref<16xf32, #tpu.memory_space<smem>>
    %6 = vector.broadcast %5 : f32 to vector<16x16xf32>
    %7 = arith.mulf %6, %1 : vector<16x16xf32>
    %c0_4 = arith.constant 0 : index
    %c1 = arith.constant 1 : index
    %c0_5 = arith.constant 0 : index
    %c0_6 = arith.constant 0 : index
    %8 = vector.load %arg2[%c0_4, %c1, %c0_5, %c0_6] : memref<2x8x16x16xf32, #tpu.memory_space<vmem>>, vector<1x1x16x16xf32>
    %9 = vector.shape_cast %8 : vector<1x1x16x16xf32> to vector<16x16xf32>
    %c1_7 = arith.constant 1 : index
    %10 = memref.load %arg3[%c1_7] : memref<16xf32, #tpu.memory_space<smem>>
    %11 = vector.broadcast %10 : f32 to vector<16x16xf32>
    %12 = arith.mulf %11, %9 : vector<16x16xf32>
    %13 = arith.addf %4, %12 : vector<16x16xf32>
    %c9 = arith.constant 9 : index
    %14 = memref.load %arg3[%c9] : memref<16xf32, #tpu.memory_space<smem>>
    %15 = vector.broadcast %14 : f32 to vector<16x16xf32>
    %16 = arith.mulf %15, %9 : vector<16x16xf32>
    %17 = arith.addf %7, %16 : vector<16x16xf32>
    %c0_8 = arith.constant 0 : index
    %c2 = arith.constant 2 : index
    %c0_9 = arith.constant 0 : index
    %c0_10 = arith.constant 0 : index
    %18 = vector.load %arg2[%c0_8, %c2, %c0_9, %c0_10] : memref<2x8x16x16xf32, #tpu.memory_space<vmem>>, vector<1x1x16x16xf32>
    %19 = vector.shape_cast %18 : vector<1x1x16x16xf32> to vector<16x16xf32>
    %c2_11 = arith.constant 2 : index
    %20 = memref.load %arg3[%c2_11] : memref<16xf32, #tpu.memory_space<smem>>
    %21 = vector.broadcast %20 : f32 to vector<16x16xf32>
    %22 = arith.mulf %21, %19 : vector<16x16xf32>
    %23 = arith.addf %13, %22 : vector<16x16xf32>
    %c10 = arith.constant 10 : index
    %24 = memref.load %arg3[%c10] : memref<16xf32, #tpu.memory_space<smem>>
    %25 = vector.broadcast %24 : f32 to vector<16x16xf32>
    %26 = arith.mulf %25, %19 : vector<16x16xf32>
    %27 = arith.addf %17, %26 : vector<16x16xf32>
    %c0_12 = arith.constant 0 : index
    %c3 = arith.constant 3 : index
    %c0_13 = arith.constant 0 : index
    %c0_14 = arith.constant 0 : index
    %28 = vector.load %arg2[%c0_12, %c3, %c0_13, %c0_14] : memref<2x8x16x16xf32, #tpu.memory_space<vmem>>, vector<1x1x16x16xf32>
    %29 = vector.shape_cast %28 : vector<1x1x16x16xf32> to vector<16x16xf32>
    %c3_15 = arith.constant 3 : index
    %30 = memref.load %arg3[%c3_15] : memref<16xf32, #tpu.memory_space<smem>>
    %31 = vector.broadcast %30 : f32 to vector<16x16xf32>
    %32 = arith.mulf %31, %29 : vector<16x16xf32>
    %33 = arith.addf %23, %32 : vector<16x16xf32>
    %c11 = arith.constant 11 : index
    %34 = memref.load %arg3[%c11] : memref<16xf32, #tpu.memory_space<smem>>
    %35 = vector.broadcast %34 : f32 to vector<16x16xf32>
    %36 = arith.mulf %35, %29 : vector<16x16xf32>
    %37 = arith.addf %27, %36 : vector<16x16xf32>
    %c0_16 = arith.constant 0 : index
    %c4 = arith.constant 4 : index
    %c0_17 = arith.constant 0 : index
    %c0_18 = arith.constant 0 : index
    %38 = vector.load %arg2[%c0_16, %c4, %c0_17, %c0_18] : memref<2x8x16x16xf32, #tpu.memory_space<vmem>>, vector<1x1x16x16xf32>
    %39 = vector.shape_cast %38 : vector<1x1x16x16xf32> to vector<16x16xf32>
    %c4_19 = arith.constant 4 : index
    %40 = memref.load %arg3[%c4_19] : memref<16xf32, #tpu.memory_space<smem>>
    %41 = vector.broadcast %40 : f32 to vector<16x16xf32>
    %42 = arith.mulf %41, %39 : vector<16x16xf32>
    %43 = arith.addf %33, %42 : vector<16x16xf32>
    %c12 = arith.constant 12 : index
    %44 = memref.load %arg3[%c12] : memref<16xf32, #tpu.memory_space<smem>>
    %45 = vector.broadcast %44 : f32 to vector<16x16xf32>
    %46 = arith.mulf %45, %39 : vector<16x16xf32>
    %47 = arith.addf %37, %46 : vector<16x16xf32>
    %c0_20 = arith.constant 0 : index
    %c5 = arith.constant 5 : index
    %c0_21 = arith.constant 0 : index
    %c0_22 = arith.constant 0 : index
    %48 = vector.load %arg2[%c0_20, %c5, %c0_21, %c0_22] : memref<2x8x16x16xf32, #tpu.memory_space<vmem>>, vector<1x1x16x16xf32>
    %49 = vector.shape_cast %48 : vector<1x1x16x16xf32> to vector<16x16xf32>
    %c5_23 = arith.constant 5 : index
    %50 = memref.load %arg3[%c5_23] : memref<16xf32, #tpu.memory_space<smem>>
    %51 = vector.broadcast %50 : f32 to vector<16x16xf32>
    %52 = arith.mulf %51, %49 : vector<16x16xf32>
    %53 = arith.addf %43, %52 : vector<16x16xf32>
    %c13 = arith.constant 13 : index
    %54 = memref.load %arg3[%c13] : memref<16xf32, #tpu.memory_space<smem>>
    %55 = vector.broadcast %54 : f32 to vector<16x16xf32>
    %56 = arith.mulf %55, %49 : vector<16x16xf32>
    %57 = arith.addf %47, %56 : vector<16x16xf32>
    %c0_24 = arith.constant 0 : index
    %c6 = arith.constant 6 : index
    %c0_25 = arith.constant 0 : index
    %c0_26 = arith.constant 0 : index
    %58 = vector.load %arg2[%c0_24, %c6, %c0_25, %c0_26] : memref<2x8x16x16xf32, #tpu.memory_space<vmem>>, vector<1x1x16x16xf32>
    %59 = vector.shape_cast %58 : vector<1x1x16x16xf32> to vector<16x16xf32>
    %c6_27 = arith.constant 6 : index
    %60 = memref.load %arg3[%c6_27] : memref<16xf32, #tpu.memory_space<smem>>
    %61 = vector.broadcast %60 : f32 to vector<16x16xf32>
    %62 = arith.mulf %61, %59 : vector<16x16xf32>
    %63 = arith.addf %53, %62 : vector<16x16xf32>
    %c14 = arith.constant 14 : index
    %64 = memref.load %arg3[%c14] : memref<16xf32, #tpu.memory_space<smem>>
    %65 = vector.broadcast %64 : f32 to vector<16x16xf32>
    %66 = arith.mulf %65, %59 : vector<16x16xf32>
    %67 = arith.addf %57, %66 : vector<16x16xf32>
    %c0_28 = arith.constant 0 : index
    %c7 = arith.constant 7 : index
    %c0_29 = arith.constant 0 : index
    %c0_30 = arith.constant 0 : index
    %68 = vector.load %arg2[%c0_28, %c7, %c0_29, %c0_30] : memref<2x8x16x16xf32, #tpu.memory_space<vmem>>, vector<1x1x16x16xf32>
    %69 = vector.shape_cast %68 : vector<1x1x16x16xf32> to vector<16x16xf32>
    %c7_31 = arith.constant 7 : index
    %70 = memref.load %arg3[%c7_31] : memref<16xf32, #tpu.memory_space<smem>>
    %71 = vector.broadcast %70 : f32 to vector<16x16xf32>
    %72 = arith.mulf %71, %69 : vector<16x16xf32>
    %73 = arith.addf %63, %72 : vector<16x16xf32>
    %c15 = arith.constant 15 : index
    %74 = memref.load %arg3[%c15] : memref<16xf32, #tpu.memory_space<smem>>
    %75 = vector.broadcast %74 : f32 to vector<16x16xf32>
    %76 = arith.mulf %75, %69 : vector<16x16xf32>
    %77 = arith.addf %67, %76 : vector<16x16xf32>
    %c0_32 = arith.constant 0 : index
    %78 = memref.load %arg4[%c0_32] : memref<2xf32, #tpu.memory_space<smem>>
    %79 = vector.broadcast %78 : f32 to vector<16x16xf32>
    %80 = arith.addf %73, %79 : vector<16x16xf32>
    %cst = arith.constant 1.000000e-01 : f32
    %81 = vector.broadcast %cst : f32 to vector<16x16xf32>
    %82 = arith.mulf %81, %80 : vector<16x16xf32>
    %83 = arith.maximumf %80, %82 : vector<16x16xf32>
    %c1_33 = arith.constant 1 : index
    %84 = memref.load %arg4[%c1_33] : memref<2xf32, #tpu.memory_space<smem>>
    %85 = vector.broadcast %84 : f32 to vector<16x16xf32>
    %86 = arith.addf %77, %85 : vector<16x16xf32>
    %cst_34 = arith.constant 1.000000e-01 : f32
    %87 = vector.broadcast %cst_34 : f32 to vector<16x16xf32>
    %88 = arith.mulf %87, %86 : vector<16x16xf32>
    %89 = arith.maximumf %86, %88 : vector<16x16xf32>
    %90 = arith.addf %83, %89 : vector<16x16xf32>
    %c1_35 = arith.constant 1 : index
    %c0_36 = arith.constant 0 : index
    %c0_37 = arith.constant 0 : index
    %c0_38 = arith.constant 0 : index
    %91 = vector.load %arg2[%c1_35, %c0_36, %c0_37, %c0_38] : memref<2x8x16x16xf32, #tpu.memory_space<vmem>>, vector<1x1x16x16xf32>
    %92 = vector.shape_cast %91 : vector<1x1x16x16xf32> to vector<16x16xf32>
    %c0_39 = arith.constant 0 : index
    %93 = memref.load %arg3[%c0_39] : memref<16xf32, #tpu.memory_space<smem>>
    %94 = vector.broadcast %93 : f32 to vector<16x16xf32>
    %95 = arith.mulf %94, %92 : vector<16x16xf32>
    %c8_40 = arith.constant 8 : index
    %96 = memref.load %arg3[%c8_40] : memref<16xf32, #tpu.memory_space<smem>>
    %97 = vector.broadcast %96 : f32 to vector<16x16xf32>
    %98 = arith.mulf %97, %92 : vector<16x16xf32>
    %c1_41 = arith.constant 1 : index
    %c1_42 = arith.constant 1 : index
    %c0_43 = arith.constant 0 : index
    %c0_44 = arith.constant 0 : index
    %99 = vector.load %arg2[%c1_41, %c1_42, %c0_43, %c0_44] : memref<2x8x16x16xf32, #tpu.memory_space<vmem>>, vector<1x1x16x16xf32>
    %100 = vector.shape_cast %99 : vector<1x1x16x16xf32> to vector<16x16xf32>
    %c1_45 = arith.constant 1 : index
    %101 = memref.load %arg3[%c1_45] : memref<16xf32, #tpu.memory_space<smem>>
    %102 = vector.broadcast %101 : f32 to vector<16x16xf32>
    %103 = arith.mulf %102, %100 : vector<16x16xf32>
    %104 = arith.addf %95, %103 : vector<16x16xf32>
    %c9_46 = arith.constant 9 : index
    %105 = memref.load %arg3[%c9_46] : memref<16xf32, #tpu.memory_space<smem>>
    %106 = vector.broadcast %105 : f32 to vector<16x16xf32>
    %107 = arith.mulf %106, %100 : vector<16x16xf32>
    %108 = arith.addf %98, %107 : vector<16x16xf32>
    %c1_47 = arith.constant 1 : index
    %c2_48 = arith.constant 2 : index
    %c0_49 = arith.constant 0 : index
    %c0_50 = arith.constant 0 : index
    %109 = vector.load %arg2[%c1_47, %c2_48, %c0_49, %c0_50] : memref<2x8x16x16xf32, #tpu.memory_space<vmem>>, vector<1x1x16x16xf32>
    %110 = vector.shape_cast %109 : vector<1x1x16x16xf32> to vector<16x16xf32>
    %c2_51 = arith.constant 2 : index
    %111 = memref.load %arg3[%c2_51] : memref<16xf32, #tpu.memory_space<smem>>
    %112 = vector.broadcast %111 : f32 to vector<16x16xf32>
    %113 = arith.mulf %112, %110 : vector<16x16xf32>
    %114 = arith.addf %104, %113 : vector<16x16xf32>
    %c10_52 = arith.constant 10 : index
    %115 = memref.load %arg3[%c10_52] : memref<16xf32, #tpu.memory_space<smem>>
    %116 = vector.broadcast %115 : f32 to vector<16x16xf32>
    %117 = arith.mulf %116, %110 : vector<16x16xf32>
    %118 = arith.addf %108, %117 : vector<16x16xf32>
    %c1_53 = arith.constant 1 : index
    %c3_54 = arith.constant 3 : index
    %c0_55 = arith.constant 0 : index
    %c0_56 = arith.constant 0 : index
    %119 = vector.load %arg2[%c1_53, %c3_54, %c0_55, %c0_56] : memref<2x8x16x16xf32, #tpu.memory_space<vmem>>, vector<1x1x16x16xf32>
    %120 = vector.shape_cast %119 : vector<1x1x16x16xf32> to vector<16x16xf32>
    %c3_57 = arith.constant 3 : index
    %121 = memref.load %arg3[%c3_57] : memref<16xf32, #tpu.memory_space<smem>>
    %122 = vector.broadcast %121 : f32 to vector<16x16xf32>
    %123 = arith.mulf %122, %120 : vector<16x16xf32>
    %124 = arith.addf %114, %123 : vector<16x16xf32>
    %c11_58 = arith.constant 11 : index
    %125 = memref.load %arg3[%c11_58] : memref<16xf32, #tpu.memory_space<smem>>
    %126 = vector.broadcast %125 : f32 to vector<16x16xf32>
    %127 = arith.mulf %126, %120 : vector<16x16xf32>
    %128 = arith.addf %118, %127 : vector<16x16xf32>
    %c1_59 = arith.constant 1 : index
    %c4_60 = arith.constant 4 : index
    %c0_61 = arith.constant 0 : index
    %c0_62 = arith.constant 0 : index
    %129 = vector.load %arg2[%c1_59, %c4_60, %c0_61, %c0_62] : memref<2x8x16x16xf32, #tpu.memory_space<vmem>>, vector<1x1x16x16xf32>
    %130 = vector.shape_cast %129 : vector<1x1x16x16xf32> to vector<16x16xf32>
    %c4_63 = arith.constant 4 : index
    %131 = memref.load %arg3[%c4_63] : memref<16xf32, #tpu.memory_space<smem>>
    %132 = vector.broadcast %131 : f32 to vector<16x16xf32>
    %133 = arith.mulf %132, %130 : vector<16x16xf32>
    %134 = arith.addf %124, %133 : vector<16x16xf32>
    %c12_64 = arith.constant 12 : index
    %135 = memref.load %arg3[%c12_64] : memref<16xf32, #tpu.memory_space<smem>>
    %136 = vector.broadcast %135 : f32 to vector<16x16xf32>
    %137 = arith.mulf %136, %130 : vector<16x16xf32>
    %138 = arith.addf %128, %137 : vector<16x16xf32>
    %c1_65 = arith.constant 1 : index
    %c5_66 = arith.constant 5 : index
    %c0_67 = arith.constant 0 : index
    %c0_68 = arith.constant 0 : index
    %139 = vector.load %arg2[%c1_65, %c5_66, %c0_67, %c0_68] : memref<2x8x16x16xf32, #tpu.memory_space<vmem>>, vector<1x1x16x16xf32>
    %140 = vector.shape_cast %139 : vector<1x1x16x16xf32> to vector<16x16xf32>
    %c5_69 = arith.constant 5 : index
    %141 = memref.load %arg3[%c5_69] : memref<16xf32, #tpu.memory_space<smem>>
    %142 = vector.broadcast %141 : f32 to vector<16x16xf32>
    %143 = arith.mulf %142, %140 : vector<16x16xf32>
    %144 = arith.addf %134, %143 : vector<16x16xf32>
    %c13_70 = arith.constant 13 : index
    %145 = memref.load %arg3[%c13_70] : memref<16xf32, #tpu.memory_space<smem>>
    %146 = vector.broadcast %145 : f32 to vector<16x16xf32>
    %147 = arith.mulf %146, %140 : vector<16x16xf32>
    %148 = arith.addf %138, %147 : vector<16x16xf32>
    %c1_71 = arith.constant 1 : index
    %c6_72 = arith.constant 6 : index
    %c0_73 = arith.constant 0 : index
    %c0_74 = arith.constant 0 : index
    %149 = vector.load %arg2[%c1_71, %c6_72, %c0_73, %c0_74] : memref<2x8x16x16xf32, #tpu.memory_space<vmem>>, vector<1x1x16x16xf32>
    %150 = vector.shape_cast %149 : vector<1x1x16x16xf32> to vector<16x16xf32>
    %c6_75 = arith.constant 6 : index
    %151 = memref.load %arg3[%c6_75] : memref<16xf32, #tpu.memory_space<smem>>
    %152 = vector.broadcast %151 : f32 to vector<16x16xf32>
    %153 = arith.mulf %152, %150 : vector<16x16xf32>
    %154 = arith.addf %144, %153 : vector<16x16xf32>
    %c14_76 = arith.constant 14 : index
    %155 = memref.load %arg3[%c14_76] : memref<16xf32, #tpu.memory_space<smem>>
    %156 = vector.broadcast %155 : f32 to vector<16x16xf32>
    %157 = arith.mulf %156, %150 : vector<16x16xf32>
    %158 = arith.addf %148, %157 : vector<16x16xf32>
    %c1_77 = arith.constant 1 : index
    %c7_78 = arith.constant 7 : index
    %c0_79 = arith.constant 0 : index
    %c0_80 = arith.constant 0 : index
    %159 = vector.load %arg2[%c1_77, %c7_78, %c0_79, %c0_80] : memref<2x8x16x16xf32, #tpu.memory_space<vmem>>, vector<1x1x16x16xf32>
    %160 = vector.shape_cast %159 : vector<1x1x16x16xf32> to vector<16x16xf32>
    %c7_81 = arith.constant 7 : index
    %161 = memref.load %arg3[%c7_81] : memref<16xf32, #tpu.memory_space<smem>>
    %162 = vector.broadcast %161 : f32 to vector<16x16xf32>
    %163 = arith.mulf %162, %160 : vector<16x16xf32>
    %164 = arith.addf %154, %163 : vector<16x16xf32>
    %c15_82 = arith.constant 15 : index
    %165 = memref.load %arg3[%c15_82] : memref<16xf32, #tpu.memory_space<smem>>
    %166 = vector.broadcast %165 : f32 to vector<16x16xf32>
    %167 = arith.mulf %166, %160 : vector<16x16xf32>
    %168 = arith.addf %158, %167 : vector<16x16xf32>
    %c0_83 = arith.constant 0 : index
    %169 = memref.load %arg4[%c0_83] : memref<2xf32, #tpu.memory_space<smem>>
    %170 = vector.broadcast %169 : f32 to vector<16x16xf32>
    %171 = arith.addf %164, %170 : vector<16x16xf32>
    %cst_84 = arith.constant 1.000000e-01 : f32
    %172 = vector.broadcast %cst_84 : f32 to vector<16x16xf32>
    %173 = arith.mulf %172, %171 : vector<16x16xf32>
    %174 = arith.maximumf %171, %173 : vector<16x16xf32>
    %c1_85 = arith.constant 1 : index
    %175 = memref.load %arg4[%c1_85] : memref<2xf32, #tpu.memory_space<smem>>
    %176 = vector.broadcast %175 : f32 to vector<16x16xf32>
    %177 = arith.addf %168, %176 : vector<16x16xf32>
    %cst_86 = arith.constant 1.000000e-01 : f32
    %178 = vector.broadcast %cst_86 : f32 to vector<16x16xf32>
    %179 = arith.mulf %178, %177 : vector<16x16xf32>
    %180 = arith.maximumf %177, %179 : vector<16x16xf32>
    %181 = arith.addf %174, %180 : vector<16x16xf32>
    %182 = tpu.concatenate %90, %181 in 0 : vector<16x16xf32>, vector<16x16xf32> -> vector<32x16xf32>
    %183 = tpu.iota {dimensions = array<i32: 0>} : vector<8x32xi32>
    %184 = tpu.iota {dimensions = array<i32: 1>} : vector<8x32xi32>
    %c4_i32 = arith.constant 4 : i32
    %185 = vector.broadcast %c4_i32 : i32 to vector<8x32xi32>
    %186 = arith.muli %183, %185 : vector<8x32xi32>
    %187 = arith.cmpi sge, %184, %186 : vector<8x32xi32>
    %c4_i32_87 = arith.constant 4 : i32
    %188 = vector.broadcast %c4_i32_87 : i32 to vector<8x32xi32>
    %189 = arith.muli %183, %188 : vector<8x32xi32>
    %c4_i32_88 = arith.constant 4 : i32
    %190 = vector.broadcast %c4_i32_88 : i32 to vector<8x32xi32>
    %191 = arith.addi %189, %190 : vector<8x32xi32>
    %192 = arith.cmpi slt, %184, %191 : vector<8x32xi32>
    %193 = arith.andi %187, %192 : vector<8x32xi1>
    %194 = arith.extui %193 : vector<8x32xi1> to vector<8x32xi32>
    %195 = arith.sitofp %194 : vector<8x32xi32> to vector<8x32xf32>
    %196 = tpu.iota {dimensions = array<i32: 0>} : vector<16x4xi32>
    %197 = tpu.iota {dimensions = array<i32: 1>} : vector<16x4xi32>
    %c4_i32_89 = arith.constant 4 : i32
    %198 = vector.broadcast %c4_i32_89 : i32 to vector<16x4xi32>
    %199 = arith.muli %197, %198 : vector<16x4xi32>
    %200 = arith.cmpi sge, %196, %199 : vector<16x4xi32>
    %c4_i32_90 = arith.constant 4 : i32
    %201 = vector.broadcast %c4_i32_90 : i32 to vector<16x4xi32>
    %202 = arith.muli %197, %201 : vector<16x4xi32>
    %c4_i32_91 = arith.constant 4 : i32
    %203 = vector.broadcast %c4_i32_91 : i32 to vector<16x4xi32>
    %204 = arith.addi %202, %203 : vector<16x4xi32>
    %205 = arith.cmpi slt, %196, %204 : vector<16x4xi32>
    %206 = arith.andi %200, %205 : vector<16x4xi1>
    %207 = arith.extui %206 : vector<16x4xi1> to vector<16x4xi32>
    %208 = arith.sitofp %207 : vector<16x4xi32> to vector<16x4xf32>
    %cst_92 = arith.constant dense<0.000000e+00> : vector<32x4xf32>
    %209 = tpu.matmul %182, %208, %cst_92 {dimension_numbers = #tpu.dot_dimension_numbers<[1], [0], [0], [1], [0, 0, 1, 1], [], []>, precision = #tpu.contract_precision<fp32>} : vector<32x16xf32>, vector<16x4xf32>, vector<32x4xf32> -> vector<32x4xf32>
    %210 = arith.mulf %182, %182 : vector<32x16xf32>
    %cst_93 = arith.constant dense<0.000000e+00> : vector<32x4xf32>
    %211 = tpu.matmul %210, %208, %cst_93 {dimension_numbers = #tpu.dot_dimension_numbers<[1], [0], [0], [1], [0, 0, 1, 1], [], []>, precision = #tpu.contract_precision<fp32>} : vector<32x16xf32>, vector<16x4xf32>, vector<32x4xf32> -> vector<32x4xf32>
    %cst_94 = arith.constant dense<0.000000e+00> : vector<8x4xf32>
    %212 = tpu.matmul %195, %209, %cst_94 {dimension_numbers = #tpu.dot_dimension_numbers<[1], [0], [0], [1], [0, 0, 1, 1], [], []>, precision = #tpu.contract_precision<fp32>} : vector<8x32xf32>, vector<32x4xf32>, vector<8x4xf32> -> vector<8x4xf32>
    %cst_95 = arith.constant dense<0.000000e+00> : vector<8x4xf32>
    %213 = tpu.matmul %195, %211, %cst_95 {dimension_numbers = #tpu.dot_dimension_numbers<[1], [0], [0], [1], [0, 0, 1, 1], [], []>, precision = #tpu.contract_precision<fp32>} : vector<8x32xf32>, vector<32x4xf32>, vector<8x4xf32> -> vector<8x4xf32>
    %214 = arith.mulf %212, %212 : vector<8x4xf32>
    %cst_96 = arith.constant 6.250000e-02 : f32
    %215 = vector.broadcast %cst_96 : f32 to vector<8x4xf32>
    %216 = arith.mulf %214, %215 : vector<8x4xf32>
    %217 = arith.subf %213, %216 : vector<8x4xf32>
    %cst_97 = arith.constant 0.0666666701 : f32
    %218 = vector.broadcast %cst_97 : f32 to vector<8x4xf32>
    %219 = arith.mulf %217, %218 : vector<8x4xf32>
    %c0_98 = arith.constant 0 : index
    %220 = memref.load %arg5[%c0_98] : memref<1xf32, #tpu.memory_space<smem>>
    %221 = vector.broadcast %220 : f32 to vector<8x4xf32>
    %222 = arith.cmpf ogt, %219, %221 : vector<8x4xf32>
    %223 = arith.extui %222 : vector<8x4xi1> to vector<8x4xi32>
    %224 = arith.sitofp %223 : vector<8x4xi32> to vector<8x4xf32>
    %225 = vector.extract_strided_slice %224 {offsets = [0, 0], sizes = [4, 4], strides = [1, 1]} : vector<8x4xf32> to vector<4x4xf32>
    %c0_99 = arith.constant 0 : index
    %c0_100 = arith.constant 0 : index
    %c0_101 = arith.constant 0 : index
    %226 = vector.load %arg6[%c0_99, %c0_100, %c0_101] : memref<2x4x4xf32, #tpu.memory_space<vmem>>, vector<1x4x4xf32>
    %227 = vector.shape_cast %226 : vector<1x4x4xf32> to vector<4x4xf32>
    %228 = vector.shape_cast %225 : vector<4x4xf32> to vector<1x4x4xf32>
    tpu.vector_store %arg6[%c0_99, %c0_100, %c0_101], %228 {strides = array<i32>} : memref<2x4x4xf32, #tpu.memory_space<vmem>>, vector<1x4x4xf32>,
    %229 = vector.extract_strided_slice %224 {offsets = [4, 0], sizes = [4, 4], strides = [1, 1]} : vector<8x4xf32> to vector<4x4xf32>
    %c1_102 = arith.constant 1 : index
    %c0_103 = arith.constant 0 : index
    %c0_104 = arith.constant 0 : index
    %230 = vector.load %arg6[%c1_102, %c0_103, %c0_104] : memref<2x4x4xf32, #tpu.memory_space<vmem>>, vector<1x4x4xf32>
    %231 = vector.shape_cast %230 : vector<1x4x4xf32> to vector<4x4xf32>
    %232 = vector.shape_cast %229 : vector<4x4xf32> to vector<1x4x4xf32>
    tpu.vector_store %arg6[%c1_102, %c0_103, %c0_104], %232 {strides = array<i32>} : memref<2x4x4xf32, #tpu.memory_space<vmem>>, vector<1x4x4xf32>,
    return
  }
  func.func @transform_0(%arg0: i32, %arg1: i32) -> (i32, i32, i32, i32) {
    %c0_i32 = arith.constant 0 : i32
    %c0_i32_0 = arith.constant 0 : i32
    %c0_i32_1 = arith.constant 0 : i32
    return %arg0, %c0_i32, %arg1, %c0_i32_0 : i32, i32, i32, i32
  }
  func.func @transform_1(%arg0: i32, %arg1: i32) -> i32 {
    %c0_i32 = arith.constant 0 : i32
    %c0_i32_0 = arith.constant 0 : i32
    return %c0_i32 : i32
  }
  func.func @transform_2(%arg0: i32, %arg1: i32) -> i32 {
    %c0_i32 = arith.constant 0 : i32
    %c0_i32_0 = arith.constant 0 : i32
    return %c0_i32 : i32
  }
  func.func @transform_3(%arg0: i32, %arg1: i32) -> i32 {
    %c0_i32 = arith.constant 0 : i32
    %c0_i32_0 = arith.constant 0 : i32
    return %c0_i32 : i32
  }
  func.func @transform_4(%arg0: i32, %arg1: i32) -> (i32, i32, i32) {
    %c0_i32 = arith.constant 0 : i32
    %c0_i32_0 = arith.constant 0 : i32
    return %arg0, %arg1, %c0_i32 : i32, i32, i32
  }
}

</mosaic_0001>

<llo_original>
// kernel: tpu_custom_call.1
$region0: #{tpu_custom_call.1}
  #allocation0 [shape = 'u32[]', space=smem, size = 0x4, offset = 0x4, fixed_abs, tag = 'smem constant byte address 0x4 - core index']
  #allocation1 [shape = 'u32[72,128]{1,0:T(1,128)}', space=vmem, size = 0x9000, scoped, tag = 'internal scratch']
  #allocation2 [shape = 'f32[1]{0:T(128)S(6)}', space=smem, size = 0x200, scoped, tag = 'scoped memory for tpu_custom_call.1']
  %s0 = inlined_call_operand.hbm [shape: f32[2,8,16,16], index: 0, kind: input, shape index: {}]
  %s1 = inlined_call_operand.vmem [shape: f32[16], index: 1, kind: input, shape index: {}]
  %s2 = inlined_call_operand.vmem [shape: f32[2], index: 2, kind: input, shape index: {}]
  %s3 = inlined_call_operand.<no memory space> [shape: f32[1], index: 3, kind: input, shape index: {}]
  %s4 = inlined_call_operand.hbm [shape: f32[2,4,4], index: 4, kind: output, shape index: {}]
  %s5 = sld [smem:[#allocation0]]
  $region38: #{tpu_custom_call.1} parent=0
    _
  %s7 = ssub.s32 1, %s5
  %s8 = scalar_select 0, %s7, %s5
  %9 = sst [smem:[#allocation2]] %s3
  $region1: #{tpu_custom_call.1} parent=0
    #allocation3 [shape = 'u8[131072]{0}', space=vmem, size = 0x20000, scoped, tag = 'input window, operand 0, single buffered']
    #allocation4 [shape = 's32[1]{0}', space=sflag, size = 0x4, scoped, tag = 'scoped memory for tpu_custom_call.1']
    #allocation5 [shape = 's32[1]{0}', space=sflag, size = 0x4, scoped, tag = 'scoped memory for tpu_custom_call.1']
    #allocation6 [shape = 's32[1]{0}', space=sflag, size = 0x4, scoped, tag = 'scoped memory for tpu_custom_call.1']
    #allocation7 [shape = 'u8[512]{0}', space=smem, size = 0x200, scoped, tag = 'input window, operand 1, single buffered']
    #allocation8 [shape = 'u8[512]{0}', space=smem, size = 0x200, scoped, tag = 'input window, operand 2, single buffered']
    #allocation9 [shape = 's32[1]{0}', space=sflag, size = 0x4, scoped, tag = 'scoped memory for tpu_custom_call.1']
    #allocation10 [shape = 'u8[4096]{0}', space=vmem, size = 0x1000, scoped, tag = 'output window, operand 0, single buffered']
    %10 = vsyncpa [#allocation4], 0
    %11 = vsyncpa [#allocation6], 0
    %12 = vsyncpa [#allocation9], 0
    %13 = vsyncpa [#allocation5], 0
    // Predicated region
    $region2: #{tpu_custom_call.1} parent=1 // pred_check
      _
    $region3: #{tpu_custom_call.1} parent=1 // pred_check_branch
      %15 = sbr.rel (0) target = $region5
    $region4: #{tpu_custom_call.1} parent=1 // pred_region
      %17 = vsyncadd [#allocation4], 0
      %s18 = sshll.u32 %s0, 4
      %s19 = int_to_ptr.hbm [resolvable:$true] %s18
      %s20 = sshll.u32 [#allocation3], 4
      %s21 = int_to_ptr.vmem [resolvable:$true] %s20
      %26 = dma.hbm_to_vmem [thread:$0]  %s19, 4096, %s21, [#allocation4], 128, 128, 8
    $region5: #{tpu_custom_call.1} parent=1 // pred_fallthru
      _
    // Predicated region
    $region6: #{tpu_custom_call.1} parent=1 // pred_check
      _
    $region7: #{tpu_custom_call.1} parent=1 // pred_check_branch
      %28 = sbr.rel (0) target = $region9
    $region8: #{tpu_custom_call.1} parent=1 // pred_region
      %30 = vsyncadd [#allocation6], 0
      %s32 = sshll.u32 %s1, 4
      %s33 = int_to_ptr.vmem [resolvable:$true] %s32
      %35 = dma.vmem_to_smem %s33, 16, [#allocation7], [#allocation6]
    $region9: #{tpu_custom_call.1} parent=1 // pred_fallthru
      _
    // Predicated region
    $region10: #{tpu_custom_call.1} parent=1 // pred_check
      _
    $region11: #{tpu_custom_call.1} parent=1 // pred_check_branch
      %37 = sbr.rel (0) target = $region13
    $region12: #{tpu_custom_call.1} parent=1 // pred_region
      %39 = vsyncadd [#allocation9], 0
      %s41 = sshll.u32 %s2, 4
      %s42 = int_to_ptr.vmem [resolvable:$true] %s41
      %44 = dma.vmem_to_smem %s42, 16, [#allocation8], [#allocation9]
    $region13: #{tpu_custom_call.1} parent=1 // pred_fallthru
      _
    // Predicated region
    $region14: #{tpu_custom_call.1} parent=1 // pred_check
      _
    $region15: #{tpu_custom_call.1} parent=1 // pred_check_branch
      %46 = sbr.rel (0) target = $region17
    $region16: #{tpu_custom_call.1} parent=1 // pred_region
      _
    $region17: #{tpu_custom_call.1} parent=1 // pred_fallthru
      _
    // Predicated region
    $region18: #{tpu_custom_call.1} parent=1 // pred_check
      _
    $region19: #{tpu_custom_call.1} parent=1 // pred_check_branch
      %48 = sbr.rel (0) target = $region21
    $region20: #{tpu_custom_call.1} parent=1 // pred_region
      %50 = dma.done [#allocation4], 4096
    $region21: #{tpu_custom_call.1} parent=1 // pred_fallthru
      _
    // Predicated region
    $region22: #{tpu_custom_call.1} parent=1 // pred_check
      _
    $region23: #{tpu_custom_call.1} parent=1 // pred_check_branch
      %52 = sbr.rel (0) target = $region25
    $region24: #{tpu_custom_call.1} parent=1 // pred_region
      %54 = dma.done [#allocation6], 16
    $region25: #{tpu_custom_call.1} parent=1 // pred_fallthru
      _
    // Predicated region
    $region26: #{tpu_custom_call.1} parent=1 // pred_check
      _
    $region27: #{tpu_custom_call.1} parent=1 // pred_check_branch
      %56 = sbr.rel (0) target = $region29
    $region28: #{tpu_custom_call.1} parent=1 // pred_region
      %58 = dma.done [#allocation9], 16
    $region29: #{tpu_custom_call.1} parent=1 // pred_fallthru
      _
    %59 = sfence
    %v60 = vld [vmem:[#allocation3] sm:$0xff]
    %v61 = vld [vmem:[#allocation3 + $0x8] sm:$0xff]
    %s62 = sld [smem:[#allocation7]]
    %v63 = vstv %s62
    %v64 = vmul.f32 %v63, %v60
    %v65 = vmul.f32 %v63, %v61
    %s66 = sld [smem:[#allocation7 + $0x8]]
    %v67 = vstv %s66
    %v68 = vmul.f32 %v67, %v60
    %v69 = vmul.f32 %v67, %v61
    %s70 = scalar_lea.vmem [#allocation3], 16
    %v71 = vld [vmem:[%s70] sm:$0xff]
    %v72 = vld [vmem:[%s70 + $0x8] sm:$0xff]
    %s73 = sld [smem:[#allocation7 + $0x1]]
    %v74 = vstv %s73
    %v75 = vmul.f32 %v74, %v71
    %v76 = vmul.f32 %v74, %v72
    %v77 = vadd.f32 %v64, %v75
    %v78 = vadd.f32 %v65, %v76
    %s79 = sld [smem:[#allocation7 + $0x9]]
    %v80 = vstv %s79
    %v81 = vmul.f32 %v80, %v71
    %v82 = vmul.f32 %v80, %v72
    %v83 = vadd.f32 %v68, %v81
    %v84 = vadd.f32 %v69, %v82
    %s85 = scalar_lea.vmem [#allocation3], 32
    %v86 = vld [vmem:[%s85] sm:$0xff]
    %v87 = vld [vmem:[%s85 + $0x8] sm:$0xff]
    %s88 = sld [smem:[#allocation7 + $0x2]]
    %v89 = vstv %s88
    %v90 = vmul.f32 %v89, %v86
    %v91 = vmul.f32 %v89, %v87
    %v92 = vadd.f32 %v77, %v90
    %v93 = vadd.f32 %v78, %v91
    %s94 = sld [smem:[#allocation7 + $0xa]]
    %v95 = vstv %s94
    %v96 = vmul.f32 %v95, %v86
    %v97 = vmul.f32 %v95, %v87
    %v98 = vadd.f32 %v83, %v96
    %v99 = vadd.f32 %v84, %v97
    %s100 = scalar_lea.vmem [#allocation3], 48
    %v101 = vld [vmem:[%s100] sm:$0xff]
    %v102 = vld [vmem:[%s100 + $0x8] sm:$0xff]
    %s103 = sld [smem:[#allocation7 + $0x3]]
    %v104 = vstv %s103
    %v105 = vmul.f32 %v104, %v101
    %v106 = vmul.f32 %v104, %v102
    %v107 = vadd.f32 %v92, %v105
    %v108 = vadd.f32 %v93, %v106
    %s109 = sld [smem:[#allocation7 + $0xb]]
    %v110 = vstv %s109
    %v111 = vmul.f32 %v110, %v101
    %v112 = vmul.f32 %v110, %v102
    %v113 = vadd.f32 %v98, %v111
    %v114 = vadd.f32 %v99, %v112
    %s115 = scalar_lea.vmem [#allocation3], 64
    %v116 = vld [vmem:[%s115] sm:$0xff]
    %v117 = vld [vmem:[%s115 + $0x8] sm:$0xff]
    %s118 = sld [smem:[#allocation7 + $0x4]]
    %v119 = vstv %s118
    %v120 = vmul.f32 %v119, %v116
    %v121 = vmul.f32 %v119, %v117
    %v122 = vadd.f32 %v107, %v120
    %v123 = vadd.f32 %v108, %v121
    %s124 = sld [smem:[#allocation7 + $0xc]]
    %v125 = vstv %s124
    %v126 = vmul.f32 %v125, %v116
    %v127 = vmul.f32 %v125, %v117
    %v128 = vadd.f32 %v113, %v126
    %v129 = vadd.f32 %v114, %v127
    %s130 = scalar_lea.vmem [#allocation3], 80
    %v131 = vld [vmem:[%s130] sm:$0xff]
    %v132 = vld [vmem:[%s130 + $0x8] sm:$0xff]
    %s133 = sld [smem:[#allocation7 + $0x5]]
    %v134 = vstv %s133
    %v135 = vmul.f32 %v134, %v131
    %v136 = vmul.f32 %v134, %v132
    %v137 = vadd.f32 %v122, %v135
    %v138 = vadd.f32 %v123, %v136
    %s139 = sld [smem:[#allocation7 + $0xd]]
    %v140 = vstv %s139
    %v141 = vmul.f32 %v140, %v131
    %v142 = vmul.f32 %v140, %v132
    %v143 = vadd.f32 %v128, %v141
    %v144 = vadd.f32 %v129, %v142
    %s145 = scalar_lea.vmem [#allocation3], 96
    %v146 = vld [vmem:[%s145] sm:$0xff]
    %v147 = vld [vmem:[%s145 + $0x8] sm:$0xff]
    %s148 = sld [smem:[#allocation7 + $0x6]]
    %v149 = vstv %s148
    %v150 = vmul.f32 %v149, %v146
    %v151 = vmul.f32 %v149, %v147
    %v152 = vadd.f32 %v137, %v150
    %v153 = vadd.f32 %v138, %v151
    %s154 = sld [smem:[#allocation7 + $0xe]]
    %v155 = vstv %s154
    %v156 = vmul.f32 %v155, %v146
    %v157 = vmul.f32 %v155, %v147
    %v158 = vadd.f32 %v143, %v156
    %v159 = vadd.f32 %v144, %v157
    %s160 = scalar_lea.vmem [#allocation3], 112
    %v161 = vld [vmem:[%s160] sm:$0xff]
    %v162 = vld [vmem:[%s160 + $0x8] sm:$0xff]
    %s163 = sld [smem:[#allocation7 + $0x7]]
    %v164 = vstv %s163
    %v165 = vmul.f32 %v164, %v161
    %v166 = vmul.f32 %v164, %v162
    %v167 = vadd.f32 %v152, %v165
    %v168 = vadd.f32 %v153, %v166
    %s169 = sld [smem:[#allocation7 + $0xf]]
    %v170 = vstv %s169
    %v171 = vmul.f32 %v170, %v161
    %v172 = vmul.f32 %v170, %v162
    %v173 = vadd.f32 %v158, %v171
    %v174 = vadd.f32 %v159, %v172
    %s175 = sld [smem:[#allocation8]]
    %v176 = vstv %s175
    %v177 = vadd.f32 %v167, %v176
    %v178 = vadd.f32 %v168, %v176
    %v179 = vmul.f32 %v177, 0.1
    %v180 = vmul.f32 %v178, 0.1
    %v181 = vmax.f32 %v177, %v179
    %v182 = vmax.f32 %v178, %v180
    %s183 = sld [smem:[#allocation8 + $0x1]]
    %v184 = vstv %s183
    %v185 = vadd.f32 %v173, %v184
    %v186 = vadd.f32 %v174, %v184
    %v187 = vmul.f32 %v185, 0.1
    %v188 = vmul.f32 %v186, 0.1
    %v189 = vmax.f32 %v185, %v187
    %v190 = vmax.f32 %v186, %v188
    %v191 = vadd.f32 %v181, %v189
    %v192 = vadd.f32 %v182, %v190
    %s193 = scalar_lea.vmem [#allocation3], 128
    %v194 = vld [vmem:[%s193] sm:$0xff]
    %v195 = vld [vmem:[%s193 + $0x8] sm:$0xff]
    %v196 = vmul.f32 %v63, %v194
    %v197 = vmul.f32 %v63, %v195
    %v198 = vmul.f32 %v67, %v194
    %v199 = vmul.f32 %v67, %v195
    %s200 = scalar_lea.vmem [#allocation3], 144
    %v201 = vld [vmem:[%s200] sm:$0xff]
    %v202 = vld [vmem:[%s200 + $0x8] sm:$0xff]
    %v203 = vmul.f32 %v74, %v201
    %v204 = vmul.f32 %v74, %v202
    %v205 = vadd.f32 %v196, %v203
    %v206 = vadd.f32 %v197, %v204
    %v207 = vmul.f32 %v80, %v201
    %v208 = vmul.f32 %v80, %v202
    %v209 = vadd.f32 %v198, %v207
    %v210 = vadd.f32 %v199, %v208
    %s211 = scalar_lea.vmem [#allocation3], 160
    %v212 = vld [vmem:[%s211] sm:$0xff]
    %v213 = vld [vmem:[%s211 + $0x8] sm:$0xff]
    %v214 = vmul.f32 %v89, %v212
    %v215 = vmul.f32 %v89, %v213
    %v216 = vadd.f32 %v205, %v214
    %v217 = vadd.f32 %v206, %v215
    %v218 = vmul.f32 %v95, %v212
    %v219 = vmul.f32 %v95, %v213
    %v220 = vadd.f32 %v209, %v218
    %v221 = vadd.f32 %v210, %v219
    %s222 = scalar_lea.vmem [#allocation3], 176
    %v223 = vld [vmem:[%s222] sm:$0xff]
    %v224 = vld [vmem:[%s222 + $0x8] sm:$0xff]
    %v225 = vmul.f32 %v104, %v223
    %v226 = vmul.f32 %v104, %v224
    %v227 = vadd.f32 %v216, %v225
    %v228 = vadd.f32 %v217, %v226
    %v229 = vmul.f32 %v110, %v223
    %v230 = vmul.f32 %v110, %v224
    %v231 = vadd.f32 %v220, %v229
    %v232 = vadd.f32 %v221, %v230
    %s233 = scalar_lea.vmem [#allocation3], 192
    %v234 = vld [vmem:[%s233] sm:$0xff]
    %v235 = vld [vmem:[%s233 + $0x8] sm:$0xff]
    %v236 = vmul.f32 %v119, %v234
    %v237 = vmul.f32 %v119, %v235
    %v238 = vadd.f32 %v227, %v236
    %v239 = vadd.f32 %v228, %v237
    %v240 = vmul.f32 %v125, %v234
    %v241 = vmul.f32 %v125, %v235
    %v242 = vadd.f32 %v231, %v240
    %v243 = vadd.f32 %v232, %v241
    %s244 = scalar_lea.vmem [#allocation3], 208
    %v245 = vld [vmem:[%s244] sm:$0xff]
    %v246 = vld [vmem:[%s244 + $0x8] sm:$0xff]
    %v247 = vmul.f32 %v134, %v245
    %v248 = vmul.f32 %v134, %v246
    %v249 = vadd.f32 %v238, %v247
    %v250 = vadd.f32 %v239, %v248
    %v251 = vmul.f32 %v140, %v245
    %v252 = vmul.f32 %v140, %v246
    %v253 = vadd.f32 %v242, %v251
    %v254 = vadd.f32 %v243, %v252
    %s255 = scalar_lea.vmem [#allocation3], 224
    %v256 = vld [vmem:[%s255] sm:$0xff]
    %v257 = vld [vmem:[%s255 + $0x8] sm:$0xff]
    %v258 = vmul.f32 %v149, %v256
    %v259 = vmul.f32 %v149, %v257
    %v260 = vadd.f32 %v249, %v258
    %v261 = vadd.f32 %v250, %v259
    %v262 = vmul.f32 %v155, %v256
    %v263 = vmul.f32 %v155, %v257
    %v264 = vadd.f32 %v253, %v262
    %v265 = vadd.f32 %v254, %v263
    %s266 = scalar_lea.vmem [#allocation3], 240
    %v267 = vld [vmem:[%s266] sm:$0xff]
    %v268 = vld [vmem:[%s266 + $0x8] sm:$0xff]
    %v269 = vmul.f32 %v164, %v267
    %v270 = vmul.f32 %v164, %v268
    %v271 = vadd.f32 %v260, %v269
    %v272 = vadd.f32 %v261, %v270
    %v273 = vmul.f32 %v170, %v267
    %v274 = vmul.f32 %v170, %v268
    %v275 = vadd.f32 %v264, %v273
    %v276 = vadd.f32 %v265, %v274
    %v277 = vadd.f32 %v271, %v176
    %v278 = vadd.f32 %v272, %v176
    %v279 = vmul.f32 %v277, 0.1
    %v280 = vmul.f32 %v278, 0.1
    %v281 = vmax.f32 %v277, %v279
    %v282 = vmax.f32 %v278, %v280
    %v283 = vadd.f32 %v275, %v184
    %v284 = vadd.f32 %v276, %v184
    %v285 = vmul.f32 %v283, 0.1
    %v286 = vmul.f32 %v284, 0.1
    %v287 = vmax.f32 %v283, %v285
    %v288 = vmax.f32 %v284, %v286
    %v289 = vadd.f32 %v281, %v287
    %v290 = vadd.f32 %v282, %v288
    %v291 = vlaneseq
    %v292 = vshrl.u32 %v291, 7
    %v293 = vlaneseq
    %v294 = vand.u32 %v293, 127
    %v295 = vmul.u32 %v292, 4
    %vm296 = vcmp.ge.s32.totalorder %v294, %v295
    %v297 = vadd.s32 %v295, 4
    %vm298 = vcmp.lt.s32.totalorder %v294, %v297
    %vm299 = vmand %vm296, %vm298
    %v300 = vsel %vm299, 1, 0
    %v301 = vcvt.s32.f32 %v300
    %v302 = vadd.s32 %v292, 8
    %v303 = vmul.u32 %v294, 4
    %vm304 = vcmp.ge.s32.totalorder %v292, %v303
    %vm305 = vcmp.ge.s32.totalorder %v302, %v303
    %v306 = vadd.s32 %v303, 4
    %vm307 = vcmp.lt.s32.totalorder %v292, %v306
    %vm308 = vcmp.lt.s32.totalorder %v302, %v306
    %vm309 = vmand %vm304, %vm307
    %vm310 = vmand %vm305, %vm308
    %v311 = vsel %vm309, 1, 0
    %v312 = vsel %vm310, 1, 0
    %v313 = vcvt.s32.f32 %v311
    %v314 = vcvt.s32.f32 %v312
    %vm315 = vcmask 130048
    %v317 = vsel %vm315, %v191, 0
    %v320 = vsel %vm315, %v192, 0
    %v323 = vsel %vm315, %v289, 0
    %v326 = vsel %vm315, %v290, 0
    %328 = vmatpush.msra.mxu0 0.0
    %329 = vmatpush.msra.mxu0 0.0
    %330 = vmatpush.msra.mxu0 0.0
    %331 = vmatpush.msra.mxu0 0.0
    %332 = vmatpush.msra.mxu0 0.0
    %333 = vmatpush.msra.mxu0 0.0
    %334 = vmatpush.msra.mxu0 0.0
    %335 = vmatpush.msra.mxu0 0.0
    %336 = vmatpush.msra.mxu0 0.0
    %337 = vmatpush.msra.mxu0 0.0
    %338 = vmatpush.msra.mxu0 0.0
    %339 = vmatpush.msra.mxu0 0.0
    %340 = vmatpush.msra.mxu0 0.0
    %341 = vmatpush.msra.mxu0 0.0
    %v342 = vand.u32 %v314, 4294901760
    %343 = vmatpush.msra.mxu0 %v342
    %v344 = vand.u32 %v313, 4294901760
    %345 = vmatpush.msra.mxu0 %v344
    %v346 = vand.u32 %v317, 4294901760
    %v347 = vsub.f32 %v317, %v346
    %v348 = vand.u32 %v347, 4294901760
    %v349 = vsub.f32 %v347, %v348
    %v350 = vand.u32 %v349, 4294901760
    %351 = vmatmul.f32.gmra.mxu0 %v350
    %v352 = vpop.f32.mrf.mxu0
    %v353 = vadd.f32 0.0, %v352
    %v354 = vand.u32 %v320, 4294901760
    %v355 = vsub.f32 %v320, %v354
    %v356 = vand.u32 %v355, 4294901760
    %v357 = vsub.f32 %v355, %v356
    %v358 = vand.u32 %v357, 4294901760
    %359 = vmatmul.f32.gmra.mxu0 %v358
    %v360 = vpop.f32.mrf.mxu0
    %v361 = vadd.f32 0.0, %v360
    %v362 = vand.u32 %v323, 4294901760
    %v363 = vsub.f32 %v323, %v362
    %v364 = vand.u32 %v363, 4294901760
    %v365 = vsub.f32 %v363, %v364
    %v366 = vand.u32 %v365, 4294901760
    %367 = vmatmul.f32.gmra.mxu0 %v366
    %v368 = vpop.f32.mrf.mxu0
    %v369 = vadd.f32 0.0, %v368
    %v370 = vand.u32 %v326, 4294901760
    %v371 = vsub.f32 %v326, %v370
    %v372 = vand.u32 %v371, 4294901760
    %v373 = vsub.f32 %v371, %v372
    %v374 = vand.u32 %v373, 4294901760
    %375 = vmatmul.f32.gmra.mxu0 %v374
    %v376 = vpop.f32.mrf.mxu0
    %v377 = vadd.f32 0.0, %v376
    %378 = vdwg.mxu0
    %379 = vmatpush.msra.mxu0 0.0
    %380 = vmatpush.msra.mxu0 0.0
    %381 = vmatpush.msra.mxu0 0.0
    %382 = vmatpush.msra.mxu0 0.0
    %383 = vmatpush.msra.mxu0 0.0
    %384 = vmatpush.msra.mxu0 0.0
    %385 = vmatpush.msra.mxu0 0.0
    %386 = vmatpush.msra.mxu0 0.0
    %387 = vmatpush.msra.mxu0 0.0
    %388 = vmatpush.msra.mxu0 0.0
    %389 = vmatpush.msra.mxu0 0.0
    %390 = vmatpush.msra.mxu0 0.0
    %391 = vmatpush.msra.mxu0 0.0
    %392 = vmatpush.msra.mxu0 0.0
    %v393 = vand.u32 %v314, 4294901760
    %v394 = vsub.f32 %v314, %v393
    %v395 = vand.u32 %v394, 4294901760
    %v396 = vsub.f32 %v394, %v395
    %v397 = vand.u32 %v396, 4294901760
    %398 = vmatpush.msra.mxu0 %v397
    %v399 = vand.u32 %v313, 4294901760
    %v400 = vsub.f32 %v313, %v399
    %v401 = vand.u32 %v400, 4294901760
    %v402 = vsub.f32 %v400, %v401
    %v403 = vand.u32 %v402, 4294901760
    %404 = vmatpush.msra.mxu0 %v403
    %v405 = vand.u32 %v317, 4294901760
    %406 = vmatmul.f32.gmra.mxu0 %v405
    %v407 = vpop.f32.mrf.mxu0
    %v408 = vadd.f32 %v353, %v407
    %v409 = vand.u32 %v320, 4294901760
    %410 = vmatmul.f32.gmra.mxu0 %v409
    %v411 = vpop.f32.mrf.mxu0
    %v412 = vadd.f32 %v361, %v411
    %v413 = vand.u32 %v323, 4294901760
    %414 = vmatmul.f32.gmra.mxu0 %v413
    %v415 = vpop.f32.mrf.mxu0
    %v416 = vadd.f32 %v369, %v415
    %v417 = vand.u32 %v326, 4294901760
    %418 = vmatmul.f32.gmra.mxu0 %v417
    %v419 = vpop.f32.mrf.mxu0
    %v420 = vadd.f32 %v377, %v419
    %421 = vdwg.mxu0
    %422 = vmatpush.msra.mxu0 0.0
    %423 = vmatpush.msra.mxu0 0.0
    %424 = vmatpush.msra.mxu0 0.0
    %425 = vmatpush.msra.mxu0 0.0
    %426 = vmatpush.msra.mxu0 0.0
    %427 = vmatpush.msra.mxu0 0.0
    %428 = vmatpush.msra.mxu0 0.0
    %429 = vmatpush.msra.mxu0 0.0
    %430 = vmatpush.msra.mxu0 0.0
    %431 = vmatpush.msra.mxu0 0.0
    %432 = vmatpush.msra.mxu0 0.0
    %433 = vmatpush.msra.mxu0 0.0
    %434 = vmatpush.msra.mxu0 0.0
    %435 = vmatpush.msra.mxu0 0.0
    %v436 = vand.u32 %v314, 4294901760
    %v437 = vsub.f32 %v314, %v436
    %438 = vmatpush.msra.mxu0 %v437
    %v439 = vand.u32 %v313, 4294901760
    %v440 = vsub.f32 %v313, %v439
    %441 = vmatpush.msra.mxu0 %v440
    %v442 = vand.u32 %v317, 4294901760
    %v443 = vsub.f32 %v317, %v442
    %444 = vmatmul.f32.gmra.mxu0 %v443
    %v445 = vpop.f32.mrf.mxu0
    %v446 = vadd.f32 %v408, %v445
    %v447 = vand.u32 %v320, 4294901760
    %v448 = vsub.f32 %v320, %v447
    %449 = vmatmul.f32.gmra.mxu0 %v448
    %v450 = vpop.f32.mrf.mxu0
    %v451 = vadd.f32 %v412, %v450
    %v452 = vand.u32 %v323, 4294901760
    %v453 = vsub.f32 %v323, %v452
    %454 = vmatmul.f32.gmra.mxu0 %v453
    %v455 = vpop.f32.mrf.mxu0
    %v456 = vadd.f32 %v416, %v455
    %v457 = vand.u32 %v326, 4294901760
    %v458 = vsub.f32 %v326, %v457
    %459 = vmatmul.f32.gmra.mxu0 %v458
    %v460 = vpop.f32.mrf.mxu0
    %v461 = vadd.f32 %v420, %v460
    %462 = vdwg.mxu0
    %463 = vmatpush.msra.mxu0 0.0
    %464 = vmatpush.msra.mxu0 0.0
    %465 = vmatpush.msra.mxu0 0.0
    %466 = vmatpush.msra.mxu0 0.0
    %467 = vmatpush.msra.mxu0 0.0
    %468 = vmatpush.msra.mxu0 0.0
    %469 = vmatpush.msra.mxu0 0.0
    %470 = vmatpush.msra.mxu0 0.0
    %471 = vmatpush.msra.mxu0 0.0
    %472 = vmatpush.msra.mxu0 0.0
    %473 = vmatpush.msra.mxu0 0.0
    %474 = vmatpush.msra.mxu0 0.0
    %475 = vmatpush.msra.mxu0 0.0
    %476 = vmatpush.msra.mxu0 0.0
    %v477 = vand.u32 %v314, 4294901760
    %478 = vmatpush.msra.mxu0 %v477
    %v479 = vand.u32 %v313, 4294901760
    %480 = vmatpush.msra.mxu0 %v479
    %v481 = vand.u32 %v317, 4294901760
    %v482 = vsub.f32 %v317, %v481
    %v483 = vand.u32 %v482, 4294901760
    %484 = vmatmul.f32.gmra.mxu0 %v483
    %v485 = vpop.f32.mrf.mxu0
    %v486 = vadd.f32 %v446, %v485
    %v487 = vand.u32 %v320, 4294901760
    %v488 = vsub.f32 %v320, %v487
    %v489 = vand.u32 %v488, 4294901760
    %490 = vmatmul.f32.gmra.mxu0 %v489
    %v491 = vpop.f32.mrf.mxu0
    %v492 = vadd.f32 %v451, %v491
    %v493 = vand.u32 %v323, 4294901760
    %v494 = vsub.f32 %v323, %v493
    %v495 = vand.u32 %v494, 4294901760
    %496 = vmatmul.f32.gmra.mxu0 %v495
    %v497 = vpop.f32.mrf.mxu0
    %v498 = vadd.f32 %v456, %v497
    %v499 = vand.u32 %v326, 4294901760
    %v500 = vsub.f32 %v326, %v499
    %v501 = vand.u32 %v500, 4294901760
    %502 = vmatmul.f32.gmra.mxu0 %v501
    %v503 = vpop.f32.mrf.mxu0
    %v504 = vadd.f32 %v461, %v503
    %505 = vdwg.mxu0
    %506 = vmatpush.msra.mxu0 0.0
    %507 = vmatpush.msra.mxu0 0.0
    %508 = vmatpush.msra.mxu0 0.0
    %509 = vmatpush.msra.mxu0 0.0
    %510 = vmatpush.msra.mxu0 0.0
    %511 = vmatpush.msra.mxu0 0.0
    %512 = vmatpush.msra.mxu0 0.0
    %513 = vmatpush.msra.mxu0 0.0
    %514 = vmatpush.msra.mxu0 0.0
    %515 = vmatpush.msra.mxu0 0.0
    %516 = vmatpush.msra.mxu0 0.0
    %517 = vmatpush.msra.mxu0 0.0
    %518 = vmatpush.msra.mxu0 0.0
    %519 = vmatpush.msra.mxu0 0.0
    %v520 = vand.u32 %v314, 4294901760
    %v521 = vsub.f32 %v314, %v520
    %v522 = vand.u32 %v521, 4294901760
    %523 = vmatpush.msra.mxu0 %v522
    %v524 = vand.u32 %v313, 4294901760
    %v525 = vsub.f32 %v313, %v524
    %v526 = vand.u32 %v525, 4294901760
    %527 = vmatpush.msra.mxu0 %v526
    %v528 = vand.u32 %v317, 4294901760
    %529 = vmatmul.f32.gmra.mxu0 %v528
    %v530 = vpop.f32.mrf.mxu0
    %v531 = vadd.f32 %v486, %v530
    %v532 = vand.u32 %v320, 4294901760
    %533 = vmatmul.f32.gmra.mxu0 %v532
    %v534 = vpop.f32.mrf.mxu0
    %v535 = vadd.f32 %v492, %v534
    %v536 = vand.u32 %v323, 4294901760
    %537 = vmatmul.f32.gmra.mxu0 %v536
    %v538 = vpop.f32.mrf.mxu0
    %v539 = vadd.f32 %v498, %v538
    %v540 = vand.u32 %v326, 4294901760
    %541 = vmatmul.f32.gmra.mxu0 %v540
    %v542 = vpop.f32.mrf.mxu0
    %v543 = vadd.f32 %v504, %v542
    %544 = vdwg.mxu0
    %545 = vmatpush.msra.mxu0 0.0
    %546 = vmatpush.msra.mxu0 0.0
    %547 = vmatpush.msra.mxu0 0.0
    %548 = vmatpush.msra.mxu0 0.0
    %549 = vmatpush.msra.mxu0 0.0
    %550 = vmatpush.msra.mxu0 0.0
    %551 = vmatpush.msra.mxu0 0.0
    %552 = vmatpush.msra.mxu0 0.0
    %553 = vmatpush.msra.mxu0 0.0
    %554 = vmatpush.msra.mxu0 0.0
    %555 = vmatpush.msra.mxu0 0.0
    %556 = vmatpush.msra.mxu0 0.0
    %557 = vmatpush.msra.mxu0 0.0
    %558 = vmatpush.msra.mxu0 0.0
    %v559 = vand.u32 %v314, 4294901760
    %560 = vmatpush.msra.mxu0 %v559
    %v561 = vand.u32 %v313, 4294901760
    %562 = vmatpush.msra.mxu0 %v561
    %v563 = vand.u32 %v317, 4294901760
    %564 = vmatmul.f32.gmra.mxu0 %v563
    %v565 = vpop.f32.mrf.mxu0
    %v566 = vadd.f32 %v531, %v565
    %v567 = vand.u32 %v320, 4294901760
    %568 = vmatmul.f32.gmra.mxu0 %v567
    %v569 = vpop.f32.mrf.mxu0
    %v570 = vadd.f32 %v535, %v569
    %v571 = vand.u32 %v323, 4294901760
    %572 = vmatmul.f32.gmra.mxu0 %v571
    %v573 = vpop.f32.mrf.mxu0
    %v574 = vadd.f32 %v539, %v573
    %v575 = vand.u32 %v326, 4294901760
    %576 = vmatmul.f32.gmra.mxu0 %v575
    %v577 = vpop.f32.mrf.mxu0
    %v578 = vadd.f32 %v543, %v577
    %579 = vdwg.mxu0
    %v580 = vmul.f32 %v191, %v191
    %v581 = vmul.f32 %v192, %v192
    %v582 = vmul.f32 %v289, %v289
    %v583 = vmul.f32 %v290, %v290
    %v585 = vsel %vm315, %v580, 0
    %v588 = vsel %vm315, %v581, 0
    %v591 = vsel %vm315, %v582, 0
    %v594 = vsel %vm315, %v583, 0
    %596 = vmatpush.msra.mxu0 0.0
    %597 = vmatpush.msra.mxu0 0.0
    %598 = vmatpush.msra.mxu0 0.0
    %599 = vmatpush.msra.mxu0 0.0
    %600 = vmatpush.msra.mxu0 0.0
    %601 = vmatpush.msra.mxu0 0.0
    %602 = vmatpush.msra.mxu0 0.0
    %603 = vmatpush.msra.mxu0 0.0
    %604 = vmatpush.msra.mxu0 0.0
    %605 = vmatpush.msra.mxu0 0.0
    %606 = vmatpush.msra.mxu0 0.0
    %607 = vmatpush.msra.mxu0 0.0
    %608 = vmatpush.msra.mxu0 0.0
    %609 = vmatpush.msra.mxu0 0.0
    %v610 = vand.u32 %v314, 4294901760
    %611 = vmatpush.msra.mxu0 %v610
    %v612 = vand.u32 %v313, 4294901760
    %613 = vmatpush.msra.mxu0 %v612
    %v614 = vand.u32 %v585, 4294901760
    %v615 = vsub.f32 %v585, %v614
    %v616 = vand.u32 %v615, 4294901760
    %v617 = vsub.f32 %v615, %v616
    %v618 = vand.u32 %v617, 4294901760
    %619 = vmatmul.f32.gmra.mxu0 %v618
    %v620 = vpop.f32.mrf.mxu0
    %v621 = vadd.f32 0.0, %v620
    %v622 = vand.u32 %v588, 4294901760
    %v623 = vsub.f32 %v588, %v622
    %v624 = vand.u32 %v623, 4294901760
    %v625 = vsub.f32 %v623, %v624
    %v626 = vand.u32 %v625, 4294901760
    %627 = vmatmul.f32.gmra.mxu0 %v626
    %v628 = vpop.f32.mrf.mxu0
    %v629 = vadd.f32 0.0, %v628
    %v630 = vand.u32 %v591, 4294901760
    %v631 = vsub.f32 %v591, %v630
    %v632 = vand.u32 %v631, 4294901760
    %v633 = vsub.f32 %v631, %v632
    %v634 = vand.u32 %v633, 4294901760
    %635 = vmatmul.f32.gmra.mxu0 %v634
    %v636 = vpop.f32.mrf.mxu0
    %v637 = vadd.f32 0.0, %v636
    %v638 = vand.u32 %v594, 4294901760
    %v639 = vsub.f32 %v594, %v638
    %v640 = vand.u32 %v639, 4294901760
    %v641 = vsub.f32 %v639, %v640
    %v642 = vand.u32 %v641, 4294901760
    %643 = vmatmul.f32.gmra.mxu0 %v642
    %v644 = vpop.f32.mrf.mxu0
    %v645 = vadd.f32 0.0, %v644
    %646 = vdwg.mxu0
    %647 = vmatpush.msra.mxu0 0.0
    %648 = vmatpush.msra.mxu0 0.0
    %649 = vmatpush.msra.mxu0 0.0
    %650 = vmatpush.msra.mxu0 0.0
    %651 = vmatpush.msra.mxu0 0.0
    %652 = vmatpush.msra.mxu0 0.0
    %653 = vmatpush.msra.mxu0 0.0
    %654 = vmatpush.msra.mxu0 0.0
    %655 = vmatpush.msra.mxu0 0.0
    %656 = vmatpush.msra.mxu0 0.0
    %657 = vmatpush.msra.mxu0 0.0
    %658 = vmatpush.msra.mxu0 0.0
    %659 = vmatpush.msra.mxu0 0.0
    %660 = vmatpush.msra.mxu0 0.0
    %v661 = vand.u32 %v314, 4294901760
    %v662 = vsub.f32 %v314, %v661
    %v663 = vand.u32 %v662, 4294901760
    %v664 = vsub.f32 %v662, %v663
    %v665 = vand.u32 %v664, 4294901760
    %666 = vmatpush.msra.mxu0 %v665
    %v667 = vand.u32 %v313, 4294901760
    %v668 = vsub.f32 %v313, %v667
    %v669 = vand.u32 %v668, 4294901760
    %v670 = vsub.f32 %v668, %v669
    %v671 = vand.u32 %v670, 4294901760
    %672 = vmatpush.msra.mxu0 %v671
    %v673 = vand.u32 %v585, 4294901760
    %674 = vmatmul.f32.gmra.mxu0 %v673
    %v675 = vpop.f32.mrf.mxu0
    %v676 = vadd.f32 %v621, %v675
    %v677 = vand.u32 %v588, 4294901760
    %678 = vmatmul.f32.gmra.mxu0 %v677
    %v679 = vpop.f32.mrf.mxu0
    %v680 = vadd.f32 %v629, %v679
    %v681 = vand.u32 %v591, 4294901760
    %682 = vmatmul.f32.gmra.mxu0 %v681
    %v683 = vpop.f32.mrf.mxu0
    %v684 = vadd.f32 %v637, %v683
    %v685 = vand.u32 %v594, 4294901760
    %686 = vmatmul.f32.gmra.mxu0 %v685
    %v687 = vpop.f32.mrf.mxu0
    %v688 = vadd.f32 %v645, %v687
    %689 = vdwg.mxu0
    %690 = vmatpush.msra.mxu0 0.0
    %691 = vmatpush.msra.mxu0 0.0
    %692 = vmatpush.msra.mxu0 0.0
    %693 = vmatpush.msra.mxu0 0.0
    %694 = vmatpush.msra.mxu0 0.0
    %695 = vmatpush.msra.mxu0 0.0
    %696 = vmatpush.msra.mxu0 0.0
    %697 = vmatpush.msra.mxu0 0.0
    %698 = vmatpush.msra.mxu0 0.0
    %699 = vmatpush.msra.mxu0 0.0
    %700 = vmatpush.msra.mxu0 0.0
    %701 = vmatpush.msra.mxu0 0.0
    %702 = vmatpush.msra.mxu0 0.0
    %703 = vmatpush.msra.mxu0 0.0
    %v704 = vand.u32 %v314, 4294901760
    %v705 = vsub.f32 %v314, %v704
    %706 = vmatpush.msra.mxu0 %v705
    %v707 = vand.u32 %v313, 4294901760
    %v708 = vsub.f32 %v313, %v707
    %709 = vmatpush.msra.mxu0 %v708
    %v710 = vand.u32 %v585, 4294901760
    %v711 = vsub.f32 %v585, %v710
    %712 = vmatmul.f32.gmra.mxu0 %v711
    %v713 = vpop.f32.mrf.mxu0
    %v714 = vadd.f32 %v676, %v713
    %v715 = vand.u32 %v588, 4294901760
    %v716 = vsub.f32 %v588, %v715
    %717 = vmatmul.f32.gmra.mxu0 %v716
    %v718 = vpop.f32.mrf.mxu0
    %v719 = vadd.f32 %v680, %v718
    %v720 = vand.u32 %v591, 4294901760
    %v721 = vsub.f32 %v591, %v720
    %722 = vmatmul.f32.gmra.mxu0 %v721
    %v723 = vpop.f32.mrf.mxu0
    %v724 = vadd.f32 %v684, %v723
    %v725 = vand.u32 %v594, 4294901760
    %v726 = vsub.f32 %v594, %v725
    %727 = vmatmul.f32.gmra.mxu0 %v726
    %v728 = vpop.f32.mrf.mxu0
    %v729 = vadd.f32 %v688, %v728
    %730 = vdwg.mxu0
    %731 = vmatpush.msra.mxu0 0.0
    %732 = vmatpush.msra.mxu0 0.0
    %733 = vmatpush.msra.mxu0 0.0
    %734 = vmatpush.msra.mxu0 0.0
    %735 = vmatpush.msra.mxu0 0.0
    %736 = vmatpush.msra.mxu0 0.0
    %737 = vmatpush.msra.mxu0 0.0
    %738 = vmatpush.msra.mxu0 0.0
    %739 = vmatpush.msra.mxu0 0.0
    %740 = vmatpush.msra.mxu0 0.0
    %741 = vmatpush.msra.mxu0 0.0
    %742 = vmatpush.msra.mxu0 0.0
    %743 = vmatpush.msra.mxu0 0.0
    %744 = vmatpush.msra.mxu0 0.0
    %v745 = vand.u32 %v314, 4294901760
    %746 = vmatpush.msra.mxu0 %v745
    %v747 = vand.u32 %v313, 4294901760
    %748 = vmatpush.msra.mxu0 %v747
    %v749 = vand.u32 %v585, 4294901760
    %v750 = vsub.f32 %v585, %v749
    %v751 = vand.u32 %v750, 4294901760
    %752 = vmatmul.f32.gmra.mxu0 %v751
    %v753 = vpop.f32.mrf.mxu0
    %v754 = vadd.f32 %v714, %v753
    %v755 = vand.u32 %v588, 4294901760
    %v756 = vsub.f32 %v588, %v755
    %v757 = vand.u32 %v756, 4294901760
    %758 = vmatmul.f32.gmra.mxu0 %v757
    %v759 = vpop.f32.mrf.mxu0
    %v760 = vadd.f32 %v719, %v759
    %v761 = vand.u32 %v591, 4294901760
    %v762 = vsub.f32 %v591, %v761
    %v763 = vand.u32 %v762, 4294901760
    %764 = vmatmul.f32.gmra.mxu0 %v763
    %v765 = vpop.f32.mrf.mxu0
    %v766 = vadd.f32 %v724, %v765
    %v767 = vand.u32 %v594, 4294901760
    %v768 = vsub.f32 %v594, %v767
    %v769 = vand.u32 %v768, 4294901760
    %770 = vmatmul.f32.gmra.mxu0 %v769
    %v771 = vpop.f32.mrf.mxu0
    %v772 = vadd.f32 %v729, %v771
    %773 = vdwg.mxu0
    %774 = vmatpush.msra.mxu0 0.0
    %775 = vmatpush.msra.mxu0 0.0
    %776 = vmatpush.msra.mxu0 0.0
    %777 = vmatpush.msra.mxu0 0.0
    %778 = vmatpush.msra.mxu0 0.0
    %779 = vmatpush.msra.mxu0 0.0
    %780 = vmatpush.msra.mxu0 0.0
    %781 = vmatpush.msra.mxu0 0.0
    %782 = vmatpush.msra.mxu0 0.0
    %783 = vmatpush.msra.mxu0 0.0
    %784 = vmatpush.msra.mxu0 0.0
    %785 = vmatpush.msra.mxu0 0.0
    %786 = vmatpush.msra.mxu0 0.0
    %787 = vmatpush.msra.mxu0 0.0
    %v788 = vand.u32 %v314, 4294901760
    %v789 = vsub.f32 %v314, %v788
    %v790 = vand.u32 %v789, 4294901760
    %791 = vmatpush.msra.mxu0 %v790
    %v792 = vand.u32 %v313, 4294901760
    %v793 = vsub.f32 %v313, %v792
    %v794 = vand.u32 %v793, 4294901760
    %795 = vmatpush.msra.mxu0 %v794
    %v796 = vand.u32 %v585, 4294901760
    %797 = vmatmul.f32.gmra.mxu0 %v796
    %v798 = vpop.f32.mrf.mxu0
    %v799 = vadd.f32 %v754, %v798
    %v800 = vand.u32 %v588, 4294901760
    %801 = vmatmul.f32.gmra.mxu0 %v800
    %v802 = vpop.f32.mrf.mxu0
    %v803 = vadd.f32 %v760, %v802
    %v804 = vand.u32 %v591, 4294901760
    %805 = vmatmul.f32.gmra.mxu0 %v804
    %v806 = vpop.f32.mrf.mxu0
    %v807 = vadd.f32 %v766, %v806
    %v808 = vand.u32 %v594, 4294901760
    %809 = vmatmul.f32.gmra.mxu0 %v808
    %v810 = vpop.f32.mrf.mxu0
    %v811 = vadd.f32 %v772, %v810
    %812 = vdwg.mxu0
    %813 = vmatpush.msra.mxu0 0.0
    %814 = vmatpush.msra.mxu0 0.0
    %815 = vmatpush.msra.mxu0 0.0
    %816 = vmatpush.msra.mxu0 0.0
    %817 = vmatpush.msra.mxu0 0.0
    %818 = vmatpush.msra.mxu0 0.0
    %819 = vmatpush.msra.mxu0 0.0
    %820 = vmatpush.msra.mxu0 0.0
    %821 = vmatpush.msra.mxu0 0.0
    %822 = vmatpush.msra.mxu0 0.0
    %823 = vmatpush.msra.mxu0 0.0
    %824 = vmatpush.msra.mxu0 0.0
    %825 = vmatpush.msra.mxu0 0.0
    %826 = vmatpush.msra.mxu0 0.0
    %v827 = vand.u32 %v314, 4294901760
    %828 = vmatpush.msra.mxu0 %v827
    %v829 = vand.u32 %v313, 4294901760
    %830 = vmatpush.msra.mxu0 %v829
    %v831 = vand.u32 %v585, 4294901760
    %832 = vmatmul.f32.gmra.mxu0 %v831
    %v833 = vpop.f32.mrf.mxu0
    %v834 = vadd.f32 %v799, %v833
    %v835 = vand.u32 %v588, 4294901760
    %836 = vmatmul.f32.gmra.mxu0 %v835
    %v837 = vpop.f32.mrf.mxu0
    %v838 = vadd.f32 %v803, %v837
    %v839 = vand.u32 %v591, 4294901760
    %840 = vmatmul.f32.gmra.mxu0 %v839
    %v841 = vpop.f32.mrf.mxu0
    %v842 = vadd.f32 %v807, %v841
    %v843 = vand.u32 %v594, 4294901760
    %844 = vmatmul.f32.gmra.mxu0 %v843
    %v845 = vpop.f32.mrf.mxu0
    %v846 = vadd.f32 %v811, %v845
    %847 = vdwg.mxu0
    %vm848 = vcmask 261120
    %v850 = vsel %vm848, %v301, 0
    %852 = vmatpush.msra.mxu0 0.0
    %853 = vmatpush.msra.mxu0 0.0
    %854 = vmatpush.msra.mxu0 0.0
    %855 = vmatpush.msra.mxu0 0.0
    %856 = vmatpush.msra.mxu0 0.0
    %857 = vmatpush.msra.mxu0 0.0
    %858 = vmatpush.msra.mxu0 0.0
    %859 = vmatpush.msra.mxu0 0.0
    %860 = vmatpush.msra.mxu0 0.0
    %861 = vmatpush.msra.mxu0 0.0
    %862 = vmatpush.msra.mxu0 0.0
    %863 = vmatpush.msra.mxu0 0.0
    %v864 = vand.u32 %v578, 4294901760
    %865 = vmatpush.msra.mxu0 %v864
    %v866 = vand.u32 %v574, 4294901760
    %867 = vmatpush.msra.mxu0 %v866
    %v868 = vand.u32 %v570, 4294901760
    %869 = vmatpush.msra.mxu0 %v868
    %v870 = vand.u32 %v566, 4294901760
    %871 = vmatpush.msra.mxu0 %v870
    %v872 = vand.u32 %v850, 4294901760
    %v873 = vsub.f32 %v850, %v872
    %v874 = vand.u32 %v873, 4294901760
    %v875 = vsub.f32 %v873, %v874
    %v876 = vand.u32 %v875, 4294901760
    %877 = vmatmul.f32.gmra.mxu0 %v876
    %v878 = vpop.f32.mrf.mxu0
    %v879 = vadd.f32 0.0, %v878
    %880 = vdwg.mxu0
    %881 = vmatpush.msra.mxu0 0.0
    %882 = vmatpush.msra.mxu0 0.0
    %883 = vmatpush.msra.mxu0 0.0
    %884 = vmatpush.msra.mxu0 0.0
    %885 = vmatpush.msra.mxu0 0.0
    %886 = vmatpush.msra.mxu0 0.0
    %887 = vmatpush.msra.mxu0 0.0
    %888 = vmatpush.msra.mxu0 0.0
    %889 = vmatpush.msra.mxu0 0.0
    %890 = vmatpush.msra.mxu0 0.0
    %891 = vmatpush.msra.mxu0 0.0
    %892 = vmatpush.msra.mxu0 0.0
    %v893 = vand.u32 %v578, 4294901760
    %v894 = vsub.f32 %v578, %v893
    %v895 = vand.u32 %v894, 4294901760
    %v896 = vsub.f32 %v894, %v895
    %v897 = vand.u32 %v896, 4294901760
    %898 = vmatpush.msra.mxu0 %v897
    %v899 = vand.u32 %v574, 4294901760
    %v900 = vsub.f32 %v574, %v899
    %v901 = vand.u32 %v900, 4294901760
    %v902 = vsub.f32 %v900, %v901
    %v903 = vand.u32 %v902, 4294901760
    %904 = vmatpush.msra.mxu0 %v903
    %v905 = vand.u32 %v570, 4294901760
    %v906 = vsub.f32 %v570, %v905
    %v907 = vand.u32 %v906, 4294901760
    %v908 = vsub.f32 %v906, %v907
    %v909 = vand.u32 %v908, 4294901760
    %910 = vmatpush.msra.mxu0 %v909
    %v911 = vand.u32 %v566, 4294901760
    %v912 = vsub.f32 %v566, %v911
    %v913 = vand.u32 %v912, 4294901760
    %v914 = vsub.f32 %v912, %v913
    %v915 = vand.u32 %v914, 4294901760
    %916 = vmatpush.msra.mxu0 %v915
    %v917 = vand.u32 %v850, 4294901760
    %918 = vmatmul.f32.gmra.mxu0 %v917
    %v919 = vpop.f32.mrf.mxu0
    %v920 = vadd.f32 %v879, %v919
    %921 = vdwg.mxu0
    %922 = vmatpush.msra.mxu0 0.0
    %923 = vmatpush.msra.mxu0 0.0
    %924 = vmatpush.msra.mxu0 0.0
    %925 = vmatpush.msra.mxu0 0.0
    %926 = vmatpush.msra.mxu0 0.0
    %927 = vmatpush.msra.mxu0 0.0
    %928 = vmatpush.msra.mxu0 0.0
    %929 = vmatpush.msra.mxu0 0.0
    %930 = vmatpush.msra.mxu0 0.0
    %931 = vmatpush.msra.mxu0 0.0
    %932 = vmatpush.msra.mxu0 0.0
    %933 = vmatpush.msra.mxu0 0.0
    %v934 = vand.u32 %v578, 4294901760
    %v935 = vsub.f32 %v578, %v934
    %936 = vmatpush.msra.mxu0 %v935
    %v937 = vand.u32 %v574, 4294901760
    %v938 = vsub.f32 %v574, %v937
    %939 = vmatpush.msra.mxu0 %v938
    %v940 = vand.u32 %v570, 4294901760
    %v941 = vsub.f32 %v570, %v940
    %942 = vmatpush.msra.mxu0 %v941
    %v943 = vand.u32 %v566, 4294901760
    %v944 = vsub.f32 %v566, %v943
    %945 = vmatpush.msra.mxu0 %v944
    %v946 = vand.u32 %v850, 4294901760
    %v947 = vsub.f32 %v850, %v946
    %948 = vmatmul.f32.gmra.mxu0 %v947
    %v949 = vpop.f32.mrf.mxu0
    %v950 = vadd.f32 %v920, %v949
    %951 = vdwg.mxu0
    %952 = vmatpush.msra.mxu0 0.0
    %953 = vmatpush.msra.mxu0 0.0
    %954 = vmatpush.msra.mxu0 0.0
    %955 = vmatpush.msra.mxu0 0.0
    %956 = vmatpush.msra.mxu0 0.0
    %957 = vmatpush.msra.mxu0 0.0
    %958 = vmatpush.msra.mxu0 0.0
    %959 = vmatpush.msra.mxu0 0.0
    %960 = vmatpush.msra.mxu0 0.0
    %961 = vmatpush.msra.mxu0 0.0
    %962 = vmatpush.msra.mxu0 0.0
    %963 = vmatpush.msra.mxu0 0.0
    %v964 = vand.u32 %v578, 4294901760
    %965 = vmatpush.msra.mxu0 %v964
    %v966 = vand.u32 %v574, 4294901760
    %967 = vmatpush.msra.mxu0 %v966
    %v968 = vand.u32 %v570, 4294901760
    %969 = vmatpush.msra.mxu0 %v968
    %v970 = vand.u32 %v566, 4294901760
    %971 = vmatpush.msra.mxu0 %v970
    %v972 = vand.u32 %v850, 4294901760
    %v973 = vsub.f32 %v850, %v972
    %v974 = vand.u32 %v973, 4294901760
    %975 = vmatmul.f32.gmra.mxu0 %v974
    %v976 = vpop.f32.mrf.mxu0
    %v977 = vadd.f32 %v950, %v976
    %978 = vdwg.mxu0
    %979 = vmatpush.msra.mxu0 0.0
    %980 = vmatpush.msra.mxu0 0.0
    %981 = vmatpush.msra.mxu0 0.0
    %982 = vmatpush.msra.mxu0 0.0
    %983 = vmatpush.msra.mxu0 0.0
    %984 = vmatpush.msra.mxu0 0.0
    %985 = vmatpush.msra.mxu0 0.0
    %986 = vmatpush.msra.mxu0 0.0
    %987 = vmatpush.msra.mxu0 0.0
    %988 = vmatpush.msra.mxu0 0.0
    %989 = vmatpush.msra.mxu0 0.0
    %990 = vmatpush.msra.mxu0 0.0
    %v991 = vand.u32 %v578, 4294901760
    %v992 = vsub.f32 %v578, %v991
    %v993 = vand.u32 %v992, 4294901760
    %994 = vmatpush.msra.mxu0 %v993
    %v995 = vand.u32 %v574, 4294901760
    %v996 = vsub.f32 %v574, %v995
    %v997 = vand.u32 %v996, 4294901760
    %998 = vmatpush.msra.mxu0 %v997
    %v999 = vand.u32 %v570, 4294901760
    %v1000 = vsub.f32 %v570, %v999
    %v1001 = vand.u32 %v1000, 4294901760
    %1002 = vmatpush.msra.mxu0 %v1001
    %v1003 = vand.u32 %v566, 4294901760
    %v1004 = vsub.f32 %v566, %v1003
    %v1005 = vand.u32 %v1004, 4294901760
    %1006 = vmatpush.msra.mxu0 %v1005
    %v1007 = vand.u32 %v850, 4294901760
    %1008 = vmatmul.f32.gmra.mxu0 %v1007
    %v1009 = vpop.f32.mrf.mxu0
    %v1010 = vadd.f32 %v977, %v1009
    %1011 = vdwg.mxu0
    %1012 = vmatpush.msra.mxu0 0.0
    %1013 = vmatpush.msra.mxu0 0.0
    %1014 = vmatpush.msra.mxu0 0.0
    %1015 = vmatpush.msra.mxu0 0.0
    %1016 = vmatpush.msra.mxu0 0.0
    %1017 = vmatpush.msra.mxu0 0.0
    %1018 = vmatpush.msra.mxu0 0.0
    %1019 = vmatpush.msra.mxu0 0.0
    %1020 = vmatpush.msra.mxu0 0.0
    %1021 = vmatpush.msra.mxu0 0.0
    %1022 = vmatpush.msra.mxu0 0.0
    %1023 = vmatpush.msra.mxu0 0.0
    %v1024 = vand.u32 %v578, 4294901760
    %1025 = vmatpush.msra.mxu0 %v1024
    %v1026 = vand.u32 %v574, 4294901760
    %1027 = vmatpush.msra.mxu0 %v1026
    %v1028 = vand.u32 %v570, 4294901760
    %1029 = vmatpush.msra.mxu0 %v1028
    %v1030 = vand.u32 %v566, 4294901760
    %1031 = vmatpush.msra.mxu0 %v1030
    %v1032 = vand.u32 %v850, 4294901760
    %1033 = vmatmul.f32.gmra.mxu0 %v1032
    %v1034 = vpop.f32.mrf.mxu0
    %v1035 = vadd.f32 %v1010, %v1034
    %1036 = vdwg.mxu0
    %1037 = vmatpush.msra.mxu0 0.0
    %1038 = vmatpush.msra.mxu0 0.0
    %1039 = vmatpush.msra.mxu0 0.0
    %1040 = vmatpush.msra.mxu0 0.0
    %1041 = vmatpush.msra.mxu0 0.0
    %1042 = vmatpush.msra.mxu0 0.0
    %1043 = vmatpush.msra.mxu0 0.0
    %1044 = vmatpush.msra.mxu0 0.0
    %1045 = vmatpush.msra.mxu0 0.0
    %1046 = vmatpush.msra.mxu0 0.0
    %1047 = vmatpush.msra.mxu0 0.0
    %1048 = vmatpush.msra.mxu0 0.0
    %v1049 = vand.u32 %v846, 4294901760
    %1050 = vmatpush.msra.mxu0 %v1049
    %v1051 = vand.u32 %v842, 4294901760
    %1052 = vmatpush.msra.mxu0 %v1051
    %v1053 = vand.u32 %v838, 4294901760
    %1054 = vmatpush.msra.mxu0 %v1053
    %v1055 = vand.u32 %v834, 4294901760
    %1056 = vmatpush.msra.mxu0 %v1055
    %v1057 = vand.u32 %v850, 4294901760
    %v1058 = vsub.f32 %v850, %v1057
    %v1059 = vand.u32 %v1058, 4294901760
    %v1060 = vsub.f32 %v1058, %v1059
    %v1061 = vand.u32 %v1060, 4294901760
    %1062 = vmatmul.f32.gmra.mxu0 %v1061
    %v1063 = vpop.f32.mrf.mxu0
    %v1064 = vadd.f32 0.0, %v1063
    %1065 = vdwg.mxu0
    %1066 = vmatpush.msra.mxu0 0.0
    %1067 = vmatpush.msra.mxu0 0.0
    %1068 = vmatpush.msra.mxu0 0.0
    %1069 = vmatpush.msra.mxu0 0.0
    %1070 = vmatpush.msra.mxu0 0.0
    %1071 = vmatpush.msra.mxu0 0.0
    %1072 = vmatpush.msra.mxu0 0.0
    %1073 = vmatpush.msra.mxu0 0.0
    %1074 = vmatpush.msra.mxu0 0.0
    %1075 = vmatpush.msra.mxu0 0.0
    %1076 = vmatpush.msra.mxu0 0.0
    %1077 = vmatpush.msra.mxu0 0.0
    %v1078 = vand.u32 %v846, 4294901760
    %v1079 = vsub.f32 %v846, %v1078
    %v1080 = vand.u32 %v1079, 4294901760
    %v1081 = vsub.f32 %v1079, %v1080
    %v1082 = vand.u32 %v1081, 4294901760
    %1083 = vmatpush.msra.mxu0 %v1082
    %v1084 = vand.u32 %v842, 4294901760
    %v1085 = vsub.f32 %v842, %v1084
    %v1086 = vand.u32 %v1085, 4294901760
    %v1087 = vsub.f32 %v1085, %v1086
    %v1088 = vand.u32 %v1087, 4294901760
    %1089 = vmatpush.msra.mxu0 %v1088
    %v1090 = vand.u32 %v838, 4294901760
    %v1091 = vsub.f32 %v838, %v1090
    %v1092 = vand.u32 %v1091, 4294901760
    %v1093 = vsub.f32 %v1091, %v1092
    %v1094 = vand.u32 %v1093, 4294901760
    %1095 = vmatpush.msra.mxu0 %v1094
    %v1096 = vand.u32 %v834, 4294901760
    %v1097 = vsub.f32 %v834, %v1096
    %v1098 = vand.u32 %v1097, 4294901760
    %v1099 = vsub.f32 %v1097, %v1098
    %v1100 = vand.u32 %v1099, 4294901760
    %1101 = vmatpush.msra.mxu0 %v1100
    %v1102 = vand.u32 %v850, 4294901760
    %1103 = vmatmul.f32.gmra.mxu0 %v1102
    %v1104 = vpop.f32.mrf.mxu0
    %v1105 = vadd.f32 %v1064, %v1104
    %1106 = vdwg.mxu0
    %1107 = vmatpush.msra.mxu0 0.0
    %1108 = vmatpush.msra.mxu0 0.0
    %1109 = vmatpush.msra.mxu0 0.0
    %1110 = vmatpush.msra.mxu0 0.0
    %1111 = vmatpush.msra.mxu0 0.0
    %1112 = vmatpush.msra.mxu0 0.0
    %1113 = vmatpush.msra.mxu0 0.0
    %1114 = vmatpush.msra.mxu0 0.0
    %1115 = vmatpush.msra.mxu0 0.0
    %1116 = vmatpush.msra.mxu0 0.0
    %1117 = vmatpush.msra.mxu0 0.0
    %1118 = vmatpush.msra.mxu0 0.0
    %v1119 = vand.u32 %v846, 4294901760
    %v1120 = vsub.f32 %v846, %v1119
    %1121 = vmatpush.msra.mxu0 %v1120
    %v1122 = vand.u32 %v842, 4294901760
    %v1123 = vsub.f32 %v842, %v1122
    %1124 = vmatpush.msra.mxu0 %v1123
    %v1125 = vand.u32 %v838, 4294901760
    %v1126 = vsub.f32 %v838, %v1125
    %1127 = vmatpush.msra.mxu0 %v1126
    %v1128 = vand.u32 %v834, 4294901760
    %v1129 = vsub.f32 %v834, %v1128
    %1130 = vmatpush.msra.mxu0 %v1129
    %v1131 = vand.u32 %v850, 4294901760
    %v1132 = vsub.f32 %v850, %v1131
    %1133 = vmatmul.f32.gmra.mxu0 %v1132
    %v1134 = vpop.f32.mrf.mxu0
    %v1135 = vadd.f32 %v1105, %v1134
    %1136 = vdwg.mxu0
    %1137 = vmatpush.msra.mxu0 0.0
    %1138 = vmatpush.msra.mxu0 0.0
    %1139 = vmatpush.msra.mxu0 0.0
    %1140 = vmatpush.msra.mxu0 0.0
    %1141 = vmatpush.msra.mxu0 0.0
    %1142 = vmatpush.msra.mxu0 0.0
    %1143 = vmatpush.msra.mxu0 0.0
    %1144 = vmatpush.msra.mxu0 0.0
    %1145 = vmatpush.msra.mxu0 0.0
    %1146 = vmatpush.msra.mxu0 0.0
    %1147 = vmatpush.msra.mxu0 0.0
    %1148 = vmatpush.msra.mxu0 0.0
    %v1149 = vand.u32 %v846, 4294901760
    %1150 = vmatpush.msra.mxu0 %v1149
    %v1151 = vand.u32 %v842, 4294901760
    %1152 = vmatpush.msra.mxu0 %v1151
    %v1153 = vand.u32 %v838, 4294901760
    %1154 = vmatpush.msra.mxu0 %v1153
    %v1155 = vand.u32 %v834, 4294901760
    %1156 = vmatpush.msra.mxu0 %v1155
    %v1157 = vand.u32 %v850, 4294901760
    %v1158 = vsub.f32 %v850, %v1157
    %v1159 = vand.u32 %v1158, 4294901760
    %1160 = vmatmul.f32.gmra.mxu0 %v1159
    %v1161 = vpop.f32.mrf.mxu0
    %v1162 = vadd.f32 %v1135, %v1161
    %1163 = vdwg.mxu0
    %1164 = vmatpush.msra.mxu0 0.0
    %1165 = vmatpush.msra.mxu0 0.0
    %1166 = vmatpush.msra.mxu0 0.0
    %1167 = vmatpush.msra.mxu0 0.0
    %1168 = vmatpush.msra.mxu0 0.0
    %1169 = vmatpush.msra.mxu0 0.0
    %1170 = vmatpush.msra.mxu0 0.0
    %1171 = vmatpush.msra.mxu0 0.0
    %1172 = vmatpush.msra.mxu0 0.0
    %1173 = vmatpush.msra.mxu0 0.0
    %1174 = vmatpush.msra.mxu0 0.0
    %1175 = vmatpush.msra.mxu0 0.0
    %v1176 = vand.u32 %v846, 4294901760
    %v1177 = vsub.f32 %v846, %v1176
    %v1178 = vand.u32 %v1177, 4294901760
    %1179 = vmatpush.msra.mxu0 %v1178
    %v1180 = vand.u32 %v842, 4294901760
    %v1181 = vsub.f32 %v842, %v1180
    %v1182 = vand.u32 %v1181, 4294901760
    %1183 = vmatpush.msra.mxu0 %v1182
    %v1184 = vand.u32 %v838, 4294901760
    %v1185 = vsub.f32 %v838, %v1184
    %v1186 = vand.u32 %v1185, 4294901760
    %1187 = vmatpush.msra.mxu0 %v1186
    %v1188 = vand.u32 %v834, 4294901760
    %v1189 = vsub.f32 %v834, %v1188
    %v1190 = vand.u32 %v1189, 4294901760
    %1191 = vmatpush.msra.mxu0 %v1190
    %v1192 = vand.u32 %v850, 4294901760
    %1193 = vmatmul.f32.gmra.mxu0 %v1192
    %v1194 = vpop.f32.mrf.mxu0
    %v1195 = vadd.f32 %v1162, %v1194
    %1196 = vdwg.mxu0
    %1197 = vmatpush.msra.mxu0 0.0
    %1198 = vmatpush.msra.mxu0 0.0
    %1199 = vmatpush.msra.mxu0 0.0
    %1200 = vmatpush.msra.mxu0 0.0
    %1201 = vmatpush.msra.mxu0 0.0
    %1202 = vmatpush.msra.mxu0 0.0
    %1203 = vmatpush.msra.mxu0 0.0
    %1204 = vmatpush.msra.mxu0 0.0
    %1205 = vmatpush.msra.mxu0 0.0
    %1206 = vmatpush.msra.mxu0 0.0
    %1207 = vmatpush.msra.mxu0 0.0
    %1208 = vmatpush.msra.mxu0 0.0
    %v1209 = vand.u32 %v846, 4294901760
    %1210 = vmatpush.msra.mxu0 %v1209
    %v1211 = vand.u32 %v842, 4294901760
    %1212 = vmatpush.msra.mxu0 %v1211
    %v1213 = vand.u32 %v838, 4294901760
    %1214 = vmatpush.msra.mxu0 %v1213
    %v1215 = vand.u32 %v834, 4294901760
    %1216 = vmatpush.msra.mxu0 %v1215
    %v1217 = vand.u32 %v850, 4294901760
    %1218 = vmatmul.f32.gmra.mxu0 %v1217
    %v1219 = vpop.f32.mrf.mxu0
    %v1220 = vadd.f32 %v1195, %v1219
    %1221 = vdwg.mxu0
    %v1222 = vmul.f32 %v1035, %v1035
    %v1223 = vmul.f32 %v1222, 0.0625
    %v1224 = vsub.f32 %v1220, %v1223
    %v1225 = vmul.f32 %v1224, 0.06666667
    %s1226 = sld [smem:[#allocation2]]
    %v1227 = vstv %s1226
    %vm1228 = vcmp.gt.f32.partialorder %v1225, %v1227
    %v1229 = vsel %vm1228, 1, 0
    %v1230 = vcvt.s32.f32 %v1229
    %vm1231 = vcmask 27648
    %1232 = vst.msk [vmem:[#allocation10] sm:$0xf] %vm1231, %v1230
    %s1233 = scalar_lea.vmem [#allocation10], 4
    %vm1234 = vcmask 31748
    %1235 = vst.msk [vmem:[%s1233 - $0x4] sm:$0xf0] %vm1234, %v1230
    // Predicated region
    $region30: #{tpu_custom_call.1} parent=1 // pred_check
      _
    $region31: #{tpu_custom_call.1} parent=1 // pred_check_branch
      %1237 = sbr.rel (0) target = $region33
    $region32: #{tpu_custom_call.1} parent=1 // pred_region
      %1239 = vsyncadd [#allocation5], 0
      %s1240 = sshll.u32 [#allocation10], 4
      %s1241 = int_to_ptr.vmem [resolvable:$true] %s1240
      %s1242 = sshll.u32 %s4, 4
      %s1243 = int_to_ptr.hbm [resolvable:$true] %s1242
      %1248 = dma.vmem_to_hbm [thread:$0]  %s1241, 128, %s1243, [#allocation5], 64, 64, 4
    $region33: #{tpu_custom_call.1} parent=1 // pred_fallthru
      _
    // Predicated region
    $region34: #{tpu_custom_call.1} parent=1 // pred_check
      _
    $region35: #{tpu_custom_call.1} parent=1 // pred_check_branch
      %1250 = sbr.rel (0) target = $region37
    $region36: #{tpu_custom_call.1} parent=1 // pred_region
      %1252 = dma.done [#allocation5], 128
    $region37: #{tpu_custom_call.1} parent=1 // pred_fallthru
      _
    %1253 = vsyncpa [#allocation4], 1
    %1254 = vsyncpa [#allocation5], 1
    %1255 = vsyncpa [#allocation6], 1
    %1256 = vsyncpa [#allocation9], 1

</llo_original>
